<compile_context>
chip_gen: v7x
topology: tpu7x:2x2x1
jax: 0.10.0
libtpu: 0.0.40
codegen_flags: <defaults>
</compile_context>

<pallas_src>
import functools
import math

import jax
import jax.numpy as jnp
import numpy as np
from jax import lax
from jax.experimental import pallas as pl
from jax.experimental.pallas import tpu as pltpu

MM_DTYPE = jnp.bfloat16          # MXU operand dtype (f32 accumulation everywhere)


# ---------------------------------------------------------------------------
# Fused kernel (one grid step == one batch element / attention window)
# ---------------------------------------------------------------------------
def _layer_norm(x, g, b, eps=1e-5):
    mean = jnp.mean(x, axis=-1, keepdims=True)
    xc = x - mean
    var = jnp.mean(xc * xc, axis=-1, keepdims=True)
    return xc * lax.rsqrt(var + eps) * g + b


def _swin_block_kernel(x_ref, wqkv_ref, bqkv_ref, wout_ref, bout_ref,
                       g1_ref, beta1_ref, wm1_ref, bm1_ref,
                       wm2_ref, bm2_ref, g2_ref, beta2_ref,
                       o_ref, *, num_heads, head_dim, mm_dtype):
    E = num_heads * head_dim
    L = x_ref.shape[0]

    x = x_ref[...]                                          # (L, E) f32

    # ---- fused QKV projection: one (L, E) @ (E, 3E) bf16 MXU matmul ----
    qkv = (jnp.dot(x.astype(mm_dtype), wqkv_ref[...],
                   preferred_element_type=jnp.float32) + bqkv_ref[...])
    qkv_mm = qkv.astype(mm_dtype)                           # single cast, sliced per head

    scale = 1.0 / math.sqrt(head_dim)
    contract_last = (((1,), (1,)), ((), ()))                # q @ k^T, no XLU transpose
    w_out = wout_ref[...]                                   # (E, E) bf16, VMEM-resident

    # ---- multi-head attention; head concat folded into the out-projection ----
    ctx = jnp.zeros((L, E), jnp.float32)
    for h in range(num_heads):                              # short static unroll
        c0 = h * head_dim
        qh = qkv_mm[:, c0:c0 + head_dim]                    # (L, hd)
        kh = qkv_mm[:, E + c0:E + c0 + head_dim]
        vh = qkv_mm[:, 2 * E + c0:2 * E + c0 + head_dim]

        s = lax.dot_general(qh, kh, contract_last,
                            preferred_element_type=jnp.float32) * scale   # (L, L) f32
        s = s - jnp.max(s, axis=-1, keepdims=True)
        e = jnp.exp(s)
        p = e * pl.reciprocal(jnp.sum(e, axis=-1, keepdims=True), approx=True)

        oh = jnp.dot(p.astype(mm_dtype), vh,
                     preferred_element_type=jnp.float32)                  # (L, hd)
        # lane-dense (L, E) f32 accumulation; sublane-aligned w_out row slice.
        ctx = ctx + jnp.dot(oh.astype(mm_dtype), w_out[c0:c0 + head_dim, :],
                            preferred_element_type=jnp.float32)

    # ---- attention bias + residual + LayerNorm1 (f32) ----
    y = _layer_norm(x + ctx + bout_ref[...], g1_ref[...], beta1_ref[...])

    # ---- MLP: Linear -> ReLU -> Linear (bf16 MXU operands, f32 accum) ----
    h1 = jnp.maximum(
        jnp.dot(y.astype(mm_dtype), wm1_ref[...],
                preferred_element_type=jnp.float32) + bm1_ref[...], 0.0)
    mlp = (jnp.dot(h1.astype(mm_dtype), wm2_ref[...],
                   preferred_element_type=jnp.float32) + bm2_ref[...])

    # ---- residual + LayerNorm2 (f32) ----
    o_ref[...] = _layer_norm(y + mlp, g2_ref[...], beta2_ref[...])


# ---------------------------------------------------------------------------
# Wrapper
# ---------------------------------------------------------------------------
@functools.partial(jax.jit, static_argnums=(2,))
def swin_block_forward(x, params, num_heads):
    """x: (B, L, E) float32, batch-first layout of the PyTorch module's input."""
    B, L, E = x.shape
    assert E % num_heads == 0
    head_dim = E // num_heads

    def w(name):   # bf16 MXU weights: halves weight DMA bytes / VMEM footprint
        return params[name].astype(MM_DTYPE)

    def f(name):   # biases / LN params stay f32 (elementwise path)
        return params[name].astype(jnp.float32)

    weights = (w('w_qkv'), f('b_qkv'), w('w_out'), f('b_out'),
               f('ln1_g'), f('ln1_b'),
               w('w_m1'), f('b_m1'), w('w_m2'), f('b_m2'),
               f('ln2_g'), f('ln2_b'))

    # Constant index_maps: weights are DMA'd once and stay VMEM-resident.
    const_specs = [pl.BlockSpec(a.shape, lambda b: (0, 0)) for a in weights]

    kernel = functools.partial(_swin_block_kernel, num_heads=num_heads,
                               head_dim=head_dim, mm_dtype=MM_DTYPE)

    out = pl.pallas_call(
        kernel,
        out_shape=jax.ShapeDtypeStruct((B, L, E), jnp.float32),
        grid=(B,),
        in_specs=[pl.BlockSpec((None, L, E), lambda b: (b, 0, 0))] + const_specs,
        out_specs=pl.BlockSpec((None, L, E), lambda b: (b, 0, 0)),
        compiler_params=pltpu.CompilerParams(
            dimension_semantics=("parallel",),
            vmem_limit_bytes=32 * 1024 * 1024),
    )(x, *weights)

    # TODO(synk): at production window sizes (large L), tile the (L, L) score
    # matrix flash-style and add a row-tile grid axis for the MLP, re-deriving
    # tile sizes against v7x's 64 MiB VMEM.
    return out


# ---------------------------------------------------------------------------
# Pure-JAX f32 reference (correctness check)
# ---------------------------------------------------------------------------
def _layer_norm_ref(x, g, b, eps=1e-5):
    mean = jnp.mean(x, axis=-1, keepdims=True)
    var = jnp.mean((x - mean) ** 2, axis=-1, keepdims=True)
    return (x - mean) * lax.rsqrt(var + eps) * g + b


def swin_block_reference(x, params, num_heads):
    B, L, E = x.shape
    hd = E // num_heads
    hp = lax.Precision.HIGHEST
    qkv = jnp.einsum('ble,ef->blf', x, params['w_qkv'],
                     precision=hp) + params['b_qkv'][0]
    q, k, v = qkv[..., :E], qkv[..., E:2 * E], qkv[..., 2 * E:]

    def split_heads(t):
        return t.reshape(B, L, num_heads, hd).transpose(0, 2, 1, 3)

    qh, kh, vh = split_heads(q), split_heads(k), split_heads(v)
    s = jnp.einsum('bhqd,bhkd->bhqk', qh, kh, precision=hp) / np.sqrt(hd)
    p = jax.nn.softmax(s, axis=-1)
    o = jnp.einsum('bhqk,bhkd->bhqd', p, vh, precision=hp)
    o = o.transpose(0, 2, 1, 3).reshape(B, L, E)
    attn_out = jnp.einsum('ble,ef->blf', o, params['w_out'],
                          precision=hp) + params['b_out'][0]
    y = _layer_norm_ref(x + attn_out, params['ln1_g'][0], params['ln1_b'][0])
    h = jax.nn.relu(jnp.einsum('ble,ef->blf', y, params['w_m1'],
                               precision=hp) + params['b_m1'][0])
    mlp = jnp.einsum('ble,ef->blf', h, params['w_m2'],
                     precision=hp) + params['b_m2'][0]
    return _layer_norm_ref(y + mlp, params['ln2_g'][0], params['ln2_b'][0])


# ---------------------------------------------------------------------------
# Parameter init (weights stored so that y = x @ W + b)
# ---------------------------------------------------------------------------
def init_params(key, dim):
    ks = jax.random.split(key, 12)
    s = 0.05

    def w(k, shape):
        return jax.random.normal(k, shape, jnp.float32) * s

    return dict(
        w_qkv=w(ks[0], (dim, 3 * dim)), b_qkv=w(ks[1], (1, 3 * dim)),
        w_out=w(ks[2], (dim, dim)),     b_out=w(ks[3], (1, dim)),
        ln1_g=1.0 + w(ks[4], (1, dim)), ln1_b=w(ks[5], (1, dim)),
        w_m1=w(ks[6], (dim, dim)),      b_m1=w(ks[7], (1, dim)),
        w_m2=w(ks[8], (dim, dim)),      b_m2=w(ks[9], (1, dim)),
        ln2_g=1.0 + w(ks[10], (1, dim)), ln2_b=w(ks[11], (1, dim)),
    )


if __name__ == "__main__":
    DIM, NUM_HEADS, SEQ, BATCH = 128, 4, 16, 2   # lane-dense E=128, head_dim=32

    key = jax.random.PRNGKey(0)
    kx, kp = jax.random.split(key)
    x = jax.random.normal(kx, (BATCH, SEQ, DIM), jnp.float32)   # (B, L, E) batch-first
    params = init_params(kp, DIM)

    out = swin_block_forward(x, params, NUM_HEADS)
    jax.block_until_ready(out)

    ref = swin_block_reference(x, params, NUM_HEADS)
    # bf16 MXU operands + approx EUP reciprocal vs. an f32 HIGHEST-precision
    # reference -> loose-ish tolerance; LN outputs are O(1).
    np.testing.assert_allclose(np.asarray(out), np.asarray(ref),
                               rtol=2e-2, atol=2e-2)
    assert out.shape == (BATCH, SEQ, DIM)

    print("KERNEL_OK")
</pallas_src>

<mosaic_0001>
module attributes {stable_mosaic.version = 11 : i64} {
  func.func @_swin_block_kernel(%arg0: i32, %arg1: memref<1x16x128xf32, #tpu.memory_space<vmem>>, %arg2: memref<128x384xbf16, #tpu.memory_space<vmem>>, %arg3: memref<1x384xf32, #tpu.memory_space<vmem>>, %arg4: memref<128x128xbf16, #tpu.memory_space<vmem>>, %arg5: memref<1x128xf32, #tpu.memory_space<vmem>>, %arg6: memref<1x128xf32, #tpu.memory_space<vmem>>, %arg7: memref<1x128xf32, #tpu.memory_space<vmem>>, %arg8: memref<128x128xbf16, #tpu.memory_space<vmem>>, %arg9: memref<1x128xf32, #tpu.memory_space<vmem>>, %arg10: memref<128x128xbf16, #tpu.memory_space<vmem>>, %arg11: memref<1x128xf32, #tpu.memory_space<vmem>>, %arg12: memref<1x128xf32, #tpu.memory_space<vmem>>, %arg13: memref<1x128xf32, #tpu.memory_space<vmem>>, %arg14: memref<1x16x128xf32, #tpu.memory_space<vmem>>) attributes {dimension_semantics = [#tpu.dimension_semantics<parallel>], iteration_bounds = array<i64: 2>, scalar_prefetch = 0 : i64, scratch_operands = 0 : i64, tpu.core_type = #tpu.core_type<tc>, window_params = [{transform_indices = @transform_0, window_bounds = array<i64: 1, 16, 128>}, {pipeline_mode = #tpu.pipeline_mode<synchronous>, transform_indices = @transform_1, window_bounds = array<i64: 128, 384>}, {pipeline_mode = #tpu.pipeline_mode<synchronous>, transform_indices = @transform_2, window_bounds = array<i64: 1, 384>}, {pipeline_mode = #tpu.pipeline_mode<synchronous>, transform_indices = @transform_3, window_bounds = array<i64: 128, 128>}, {pipeline_mode = #tpu.pipeline_mode<synchronous>, transform_indices = @transform_4, window_bounds = array<i64: 1, 128>}, {pipeline_mode = #tpu.pipeline_mode<synchronous>, transform_indices = @transform_5, window_bounds = array<i64: 1, 128>}, {pipeline_mode = #tpu.pipeline_mode<synchronous>, transform_indices = @transform_6, window_bounds = array<i64: 1, 128>}, {pipeline_mode = #tpu.pipeline_mode<synchronous>, transform_indices = @transform_7, window_bounds = array<i64: 128, 128>}, {pipeline_mode = #tpu.pipeline_mode<synchronous>, transform_indices = @transform_8, window_bounds = array<i64: 1, 128>}, {pipeline_mode = #tpu.pipeline_mode<synchronous>, transform_indices = @transform_9, window_bounds = array<i64: 128, 128>}, {pipeline_mode = #tpu.pipeline_mode<synchronous>, transform_indices = @transform_10, window_bounds = array<i64: 1, 128>}, {pipeline_mode = #tpu.pipeline_mode<synchronous>, transform_indices = @transform_11, window_bounds = array<i64: 1, 128>}, {pipeline_mode = #tpu.pipeline_mode<synchronous>, transform_indices = @transform_12, window_bounds = array<i64: 1, 128>}, {transform_indices = @transform_13, window_bounds = array<i64: 1, 16, 128>}]} {
    %c0 = arith.constant 0 : index
    %c0_0 = arith.constant 0 : index
    %c0_1 = arith.constant 0 : index
    %0 = vector.load %arg1[%c0, %c0_0, %c0_1] : memref<1x16x128xf32, #tpu.memory_space<vmem>>, vector<1x16x128xf32>
    %1 = vector.shape_cast %0 : vector<1x16x128xf32> to vector<16x128xf32>
    %2 = arith.truncf %1 : vector<16x128xf32> to vector<16x128xbf16>
    %c0_2 = arith.constant 0 : index
    %c0_3 = arith.constant 0 : index
    %3 = vector.load %arg2[%c0_2, %c0_3] : memref<128x384xbf16, #tpu.memory_space<vmem>>, vector<128x384xbf16>
    %cst = arith.constant dense<0.000000e+00> : vector<16x384xf32>
    %4 = tpu.matmul %2, %3, %cst {dimension_numbers = #tpu.dot_dimension_numbers<[1], [0], [0], [1], [0, 0, 1, 1], [], []>} : vector<16x128xbf16>, vector<128x384xbf16>, vector<16x384xf32> -> vector<16x384xf32>
    %c0_4 = arith.constant 0 : index
    %c0_5 = arith.constant 0 : index
    %5 = vector.load %arg3[%c0_4, %c0_5] : memref<1x384xf32, #tpu.memory_space<vmem>>, vector<1x384xf32>
    %6 = vector.broadcast %5 : vector<1x384xf32> to vector<16x384xf32>
    %7 = arith.addf %4, %6 : vector<16x384xf32>
    %8 = arith.truncf %7 : vector<16x384xf32> to vector<16x384xbf16>
    %c0_6 = arith.constant 0 : index
    %c0_7 = arith.constant 0 : index
    %9 = vector.load %arg4[%c0_6, %c0_7] : memref<128x128xbf16, #tpu.memory_space<vmem>>, vector<128x128xbf16>
    %cst_8 = arith.constant 0.000000e+00 : f32
    %10 = vector.broadcast %cst_8 : f32 to vector<16x128xf32>
    %11 = vector.extract_strided_slice %8 {offsets = [0, 0], sizes = [16, 32], strides = [1, 1]} : vector<16x384xbf16> to vector<16x32xbf16>
    %12 = vector.extract_strided_slice %8 {offsets = [0, 128], sizes = [16, 32], strides = [1, 1]} : vector<16x384xbf16> to vector<16x32xbf16>
    %13 = vector.extract_strided_slice %8 {offsets = [0, 256], sizes = [16, 32], strides = [1, 1]} : vector<16x384xbf16> to vector<16x32xbf16>
    %cst_9 = arith.constant dense<0.000000e+00> : vector<16x16xf32>
    %14 = tpu.matmul %11, %12, %cst_9 {dimension_numbers = #tpu.dot_dimension_numbers<[1], [1], [0], [0], [0, 0, 1, 0], [], []>} : vector<16x32xbf16>, vector<16x32xbf16>, vector<16x16xf32> -> vector<16x16xf32>
    %cst_10 = arith.constant 0.176776692 : f32
    %15 = vector.broadcast %cst_10 : f32 to vector<16x16xf32>
    %16 = arith.mulf %14, %15 : vector<16x16xf32>
    %cst_11 = arith.constant dense<0xFF800000> : vector<16xf32>
    %17 = vector.multi_reduction <maximumf>, %16, %cst_11 [1] : vector<16x16xf32> to vector<16xf32>
    %18 = vector.shape_cast %17 : vector<16xf32> to vector<16x1xf32>
    %19 = vector.broadcast %18 : vector<16x1xf32> to vector<16x16xf32>
    %20 = arith.subf %16, %19 : vector<16x16xf32>
    %21 = math.exp %20 : vector<16x16xf32>
    %cst_12 = arith.constant dense<0.000000e+00> : vector<16xf32>
    %22 = vector.multi_reduction <add>, %21, %cst_12 [1] : vector<16x16xf32> to vector<16xf32>
    %23 = vector.shape_cast %22 : vector<16xf32> to vector<16x1xf32>
    %24 = tpu.reciprocal %23 {approx = true} : vector<16x1xf32> -> vector<16x1xf32>
    %25 = vector.broadcast %24 : vector<16x1xf32> to vector<16x16xf32>
    %26 = arith.mulf %21, %25 : vector<16x16xf32>
    %27 = arith.truncf %26 : vector<16x16xf32> to vector<16x16xbf16>
    %cst_13 = arith.constant dense<0.000000e+00> : vector<16x32xf32>
    %28 = tpu.matmul %27, %13, %cst_13 {dimension_numbers = #tpu.dot_dimension_numbers<[1], [0], [0], [1], [0, 0, 1, 1], [], []>} : vector<16x16xbf16>, vector<16x32xbf16>, vector<16x32xf32> -> vector<16x32xf32>
    %29 = arith.truncf %28 : vector<16x32xf32> to vector<16x32xbf16>
    %30 = vector.extract_strided_slice %9 {offsets = [0, 0], sizes = [32, 128], strides = [1, 1]} : vector<128x128xbf16> to vector<32x128xbf16>
    %cst_14 = arith.constant dense<0.000000e+00> : vector<16x128xf32>
    %31 = tpu.matmul %29, %30, %cst_14 {dimension_numbers = #tpu.dot_dimension_numbers<[1], [0], [0], [1], [0, 0, 1, 1], [], []>} : vector<16x32xbf16>, vector<32x128xbf16>, vector<16x128xf32> -> vector<16x128xf32>
    %32 = arith.addf %10, %31 : vector<16x128xf32>
    %33 = vector.extract_strided_slice %8 {offsets = [0, 32], sizes = [16, 32], strides = [1, 1]} : vector<16x384xbf16> to vector<16x32xbf16>
    %34 = vector.extract_strided_slice %8 {offsets = [0, 160], sizes = [16, 32], strides = [1, 1]} : vector<16x384xbf16> to vector<16x32xbf16>
    %35 = vector.extract_strided_slice %8 {offsets = [0, 288], sizes = [16, 32], strides = [1, 1]} : vector<16x384xbf16> to vector<16x32xbf16>
    %cst_15 = arith.constant dense<0.000000e+00> : vector<16x16xf32>
    %36 = tpu.matmul %33, %34, %cst_15 {dimension_numbers = #tpu.dot_dimension_numbers<[1], [1], [0], [0], [0, 0, 1, 0], [], []>} : vector<16x32xbf16>, vector<16x32xbf16>, vector<16x16xf32> -> vector<16x16xf32>
    %cst_16 = arith.constant 0.176776692 : f32
    %37 = vector.broadcast %cst_16 : f32 to vector<16x16xf32>
    %38 = arith.mulf %36, %37 : vector<16x16xf32>
    %cst_17 = arith.constant dense<0xFF800000> : vector<16xf32>
    %39 = vector.multi_reduction <maximumf>, %38, %cst_17 [1] : vector<16x16xf32> to vector<16xf32>
    %40 = vector.shape_cast %39 : vector<16xf32> to vector<16x1xf32>
    %41 = vector.broadcast %40 : vector<16x1xf32> to vector<16x16xf32>
    %42 = arith.subf %38, %41 : vector<16x16xf32>
    %43 = math.exp %42 : vector<16x16xf32>
    %cst_18 = arith.constant dense<0.000000e+00> : vector<16xf32>
    %44 = vector.multi_reduction <add>, %43, %cst_18 [1] : vector<16x16xf32> to vector<16xf32>
    %45 = vector.shape_cast %44 : vector<16xf32> to vector<16x1xf32>
    %46 = tpu.reciprocal %45 {approx = true} : vector<16x1xf32> -> vector<16x1xf32>
    %47 = vector.broadcast %46 : vector<16x1xf32> to vector<16x16xf32>
    %48 = arith.mulf %43, %47 : vector<16x16xf32>
    %49 = arith.truncf %48 : vector<16x16xf32> to vector<16x16xbf16>
    %cst_19 = arith.constant dense<0.000000e+00> : vector<16x32xf32>
    %50 = tpu.matmul %49, %35, %cst_19 {dimension_numbers = #tpu.dot_dimension_numbers<[1], [0], [0], [1], [0, 0, 1, 1], [], []>} : vector<16x16xbf16>, vector<16x32xbf16>, vector<16x32xf32> -> vector<16x32xf32>
    %51 = arith.truncf %50 : vector<16x32xf32> to vector<16x32xbf16>
    %52 = vector.extract_strided_slice %9 {offsets = [32, 0], sizes = [32, 128], strides = [1, 1]} : vector<128x128xbf16> to vector<32x128xbf16>
    %cst_20 = arith.constant dense<0.000000e+00> : vector<16x128xf32>
    %53 = tpu.matmul %51, %52, %cst_20 {dimension_numbers = #tpu.dot_dimension_numbers<[1], [0], [0], [1], [0, 0, 1, 1], [], []>} : vector<16x32xbf16>, vector<32x128xbf16>, vector<16x128xf32> -> vector<16x128xf32>
    %54 = arith.addf %32, %53 : vector<16x128xf32>
    %55 = vector.extract_strided_slice %8 {offsets = [0, 64], sizes = [16, 32], strides = [1, 1]} : vector<16x384xbf16> to vector<16x32xbf16>
    %56 = vector.extract_strided_slice %8 {offsets = [0, 192], sizes = [16, 32], strides = [1, 1]} : vector<16x384xbf16> to vector<16x32xbf16>
    %57 = vector.extract_strided_slice %8 {offsets = [0, 320], sizes = [16, 32], strides = [1, 1]} : vector<16x384xbf16> to vector<16x32xbf16>
    %cst_21 = arith.constant dense<0.000000e+00> : vector<16x16xf32>
    %58 = tpu.matmul %55, %56, %cst_21 {dimension_numbers = #tpu.dot_dimension_numbers<[1], [1], [0], [0], [0, 0, 1, 0], [], []>} : vector<16x32xbf16>, vector<16x32xbf16>, vector<16x16xf32> -> vector<16x16xf32>
    %cst_22 = arith.constant 0.176776692 : f32
    %59 = vector.broadcast %cst_22 : f32 to vector<16x16xf32>
    %60 = arith.mulf %58, %59 : vector<16x16xf32>
    %cst_23 = arith.constant dense<0xFF800000> : vector<16xf32>
    %61 = vector.multi_reduction <maximumf>, %60, %cst_23 [1] : vector<16x16xf32> to vector<16xf32>
    %62 = vector.shape_cast %61 : vector<16xf32> to vector<16x1xf32>
    %63 = vector.broadcast %62 : vector<16x1xf32> to vector<16x16xf32>
    %64 = arith.subf %60, %63 : vector<16x16xf32>
    %65 = math.exp %64 : vector<16x16xf32>
    %cst_24 = arith.constant dense<0.000000e+00> : vector<16xf32>
    %66 = vector.multi_reduction <add>, %65, %cst_24 [1] : vector<16x16xf32> to vector<16xf32>
    %67 = vector.shape_cast %66 : vector<16xf32> to vector<16x1xf32>
    %68 = tpu.reciprocal %67 {approx = true} : vector<16x1xf32> -> vector<16x1xf32>
    %69 = vector.broadcast %68 : vector<16x1xf32> to vector<16x16xf32>
    %70 = arith.mulf %65, %69 : vector<16x16xf32>
    %71 = arith.truncf %70 : vector<16x16xf32> to vector<16x16xbf16>
    %cst_25 = arith.constant dense<0.000000e+00> : vector<16x32xf32>
    %72 = tpu.matmul %71, %57, %cst_25 {dimension_numbers = #tpu.dot_dimension_numbers<[1], [0], [0], [1], [0, 0, 1, 1], [], []>} : vector<16x16xbf16>, vector<16x32xbf16>, vector<16x32xf32> -> vector<16x32xf32>
    %73 = arith.truncf %72 : vector<16x32xf32> to vector<16x32xbf16>
    %74 = vector.extract_strided_slice %9 {offsets = [64, 0], sizes = [32, 128], strides = [1, 1]} : vector<128x128xbf16> to vector<32x128xbf16>
    %cst_26 = arith.constant dense<0.000000e+00> : vector<16x128xf32>
    %75 = tpu.matmul %73, %74, %cst_26 {dimension_numbers = #tpu.dot_dimension_numbers<[1], [0], [0], [1], [0, 0, 1, 1], [], []>} : vector<16x32xbf16>, vector<32x128xbf16>, vector<16x128xf32> -> vector<16x128xf32>
    %76 = arith.addf %54, %75 : vector<16x128xf32>
    %77 = vector.extract_strided_slice %8 {offsets = [0, 96], sizes = [16, 32], strides = [1, 1]} : vector<16x384xbf16> to vector<16x32xbf16>
    %78 = vector.extract_strided_slice %8 {offsets = [0, 224], sizes = [16, 32], strides = [1, 1]} : vector<16x384xbf16> to vector<16x32xbf16>
    %79 = vector.extract_strided_slice %8 {offsets = [0, 352], sizes = [16, 32], strides = [1, 1]} : vector<16x384xbf16> to vector<16x32xbf16>
    %cst_27 = arith.constant dense<0.000000e+00> : vector<16x16xf32>
    %80 = tpu.matmul %77, %78, %cst_27 {dimension_numbers = #tpu.dot_dimension_numbers<[1], [1], [0], [0], [0, 0, 1, 0], [], []>} : vector<16x32xbf16>, vector<16x32xbf16>, vector<16x16xf32> -> vector<16x16xf32>
    %cst_28 = arith.constant 0.176776692 : f32
    %81 = vector.broadcast %cst_28 : f32 to vector<16x16xf32>
    %82 = arith.mulf %80, %81 : vector<16x16xf32>
    %cst_29 = arith.constant dense<0xFF800000> : vector<16xf32>
    %83 = vector.multi_reduction <maximumf>, %82, %cst_29 [1] : vector<16x16xf32> to vector<16xf32>
    %84 = vector.shape_cast %83 : vector<16xf32> to vector<16x1xf32>
    %85 = vector.broadcast %84 : vector<16x1xf32> to vector<16x16xf32>
    %86 = arith.subf %82, %85 : vector<16x16xf32>
    %87 = math.exp %86 : vector<16x16xf32>
    %cst_30 = arith.constant dense<0.000000e+00> : vector<16xf32>
    %88 = vector.multi_reduction <add>, %87, %cst_30 [1] : vector<16x16xf32> to vector<16xf32>
    %89 = vector.shape_cast %88 : vector<16xf32> to vector<16x1xf32>
    %90 = tpu.reciprocal %89 {approx = true} : vector<16x1xf32> -> vector<16x1xf32>
    %91 = vector.broadcast %90 : vector<16x1xf32> to vector<16x16xf32>
    %92 = arith.mulf %87, %91 : vector<16x16xf32>
    %93 = arith.truncf %92 : vector<16x16xf32> to vector<16x16xbf16>
    %cst_31 = arith.constant dense<0.000000e+00> : vector<16x32xf32>
    %94 = tpu.matmul %93, %79, %cst_31 {dimension_numbers = #tpu.dot_dimension_numbers<[1], [0], [0], [1], [0, 0, 1, 1], [], []>} : vector<16x16xbf16>, vector<16x32xbf16>, vector<16x32xf32> -> vector<16x32xf32>
    %95 = arith.truncf %94 : vector<16x32xf32> to vector<16x32xbf16>
    %96 = vector.extract_strided_slice %9 {offsets = [96, 0], sizes = [32, 128], strides = [1, 1]} : vector<128x128xbf16> to vector<32x128xbf16>
    %cst_32 = arith.constant dense<0.000000e+00> : vector<16x128xf32>
    %97 = tpu.matmul %95, %96, %cst_32 {dimension_numbers = #tpu.dot_dimension_numbers<[1], [0], [0], [1], [0, 0, 1, 1], [], []>} : vector<16x32xbf16>, vector<32x128xbf16>, vector<16x128xf32> -> vector<16x128xf32>
    %98 = arith.addf %76, %97 : vector<16x128xf32>
    %99 = arith.addf %1, %98 : vector<16x128xf32>
    %c0_33 = arith.constant 0 : index
    %c0_34 = arith.constant 0 : index
    %100 = vector.load %arg5[%c0_33, %c0_34] : memref<1x128xf32, #tpu.memory_space<vmem>>, vector<1x128xf32>
    %101 = vector.broadcast %100 : vector<1x128xf32> to vector<16x128xf32>
    %102 = arith.addf %99, %101 : vector<16x128xf32>
    %c0_35 = arith.constant 0 : index
    %c0_36 = arith.constant 0 : index
    %103 = vector.load %arg6[%c0_35, %c0_36] : memref<1x128xf32, #tpu.memory_space<vmem>>, vector<1x128xf32>
    %c0_37 = arith.constant 0 : index
    %c0_38 = arith.constant 0 : index
    %104 = vector.load %arg7[%c0_37, %c0_38] : memref<1x128xf32, #tpu.memory_space<vmem>>, vector<1x128xf32>
    %cst_39 = arith.constant dense<0.000000e+00> : vector<16xf32>
    %105 = vector.multi_reduction <add>, %102, %cst_39 [1] : vector<16x128xf32> to vector<16xf32>
    %106 = vector.shape_cast %105 : vector<16xf32> to vector<16x1xf32>
    %cst_40 = arith.constant 1.280000e+02 : f32
    %107 = vector.broadcast %cst_40 : f32 to vector<16x1xf32>
    %108 = arith.divf %106, %107 : vector<16x1xf32>
    %109 = vector.broadcast %108 : vector<16x1xf32> to vector<16x128xf32>
    %110 = arith.subf %102, %109 : vector<16x128xf32>
    %111 = arith.mulf %110, %110 : vector<16x128xf32>
    %cst_41 = arith.constant dense<0.000000e+00> : vector<16xf32>
    %112 = vector.multi_reduction <add>, %111, %cst_41 [1] : vector<16x128xf32> to vector<16xf32>
    %113 = vector.shape_cast %112 : vector<16xf32> to vector<16x1xf32>
    %cst_42 = arith.constant 1.280000e+02 : f32
    %114 = vector.broadcast %cst_42 : f32 to vector<16x1xf32>
    %115 = arith.divf %113, %114 : vector<16x1xf32>
    %cst_43 = arith.constant 9.99999974E-6 : f32
    %116 = vector.broadcast %cst_43 : f32 to vector<16x1xf32>
    %117 = arith.addf %115, %116 : vector<16x1xf32>
    %118 = math.rsqrt %117 : vector<16x1xf32>
    %119 = vector.broadcast %118 : vector<16x1xf32> to vector<16x128xf32>
    %120 = arith.mulf %110, %119 : vector<16x128xf32>
    %121 = vector.broadcast %103 : vector<1x128xf32> to vector<16x128xf32>
    %122 = arith.mulf %120, %121 : vector<16x128xf32>
    %123 = vector.broadcast %104 : vector<1x128xf32> to vector<16x128xf32>
    %124 = arith.addf %122, %123 : vector<16x128xf32>
    %125 = arith.truncf %124 : vector<16x128xf32> to vector<16x128xbf16>
    %c0_44 = arith.constant 0 : index
    %c0_45 = arith.constant 0 : index
    %126 = vector.load %arg8[%c0_44, %c0_45] : memref<128x128xbf16, #tpu.memory_space<vmem>>, vector<128x128xbf16>
    %cst_46 = arith.constant dense<0.000000e+00> : vector<16x128xf32>
    %127 = tpu.matmul %125, %126, %cst_46 {dimension_numbers = #tpu.dot_dimension_numbers<[1], [0], [0], [1], [0, 0, 1, 1], [], []>} : vector<16x128xbf16>, vector<128x128xbf16>, vector<16x128xf32> -> vector<16x128xf32>
    %c0_47 = arith.constant 0 : index
    %c0_48 = arith.constant 0 : index
    %128 = vector.load %arg9[%c0_47, %c0_48] : memref<1x128xf32, #tpu.memory_space<vmem>>, vector<1x128xf32>
    %129 = vector.broadcast %128 : vector<1x128xf32> to vector<16x128xf32>
    %130 = arith.addf %127, %129 : vector<16x128xf32>
    %cst_49 = arith.constant 0.000000e+00 : f32
    %131 = vector.broadcast %cst_49 : f32 to vector<16x128xf32>
    %132 = arith.maximumf %130, %131 : vector<16x128xf32>
    %133 = arith.truncf %132 : vector<16x128xf32> to vector<16x128xbf16>
    %c0_50 = arith.constant 0 : index
    %c0_51 = arith.constant 0 : index
    %134 = vector.load %arg10[%c0_50, %c0_51] : memref<128x128xbf16, #tpu.memory_space<vmem>>, vector<128x128xbf16>
    %cst_52 = arith.constant dense<0.000000e+00> : vector<16x128xf32>
    %135 = tpu.matmul %133, %134, %cst_52 {dimension_numbers = #tpu.dot_dimension_numbers<[1], [0], [0], [1], [0, 0, 1, 1], [], []>} : vector<16x128xbf16>, vector<128x128xbf16>, vector<16x128xf32> -> vector<16x128xf32>
    %c0_53 = arith.constant 0 : index
    %c0_54 = arith.constant 0 : index
    %136 = vector.load %arg11[%c0_53, %c0_54] : memref<1x128xf32, #tpu.memory_space<vmem>>, vector<1x128xf32>
    %137 = vector.broadcast %136 : vector<1x128xf32> to vector<16x128xf32>
    %138 = arith.addf %135, %137 : vector<16x128xf32>
    %139 = arith.addf %124, %138 : vector<16x128xf32>
    %c0_55 = arith.constant 0 : index
    %c0_56 = arith.constant 0 : index
    %140 = vector.load %arg12[%c0_55, %c0_56] : memref<1x128xf32, #tpu.memory_space<vmem>>, vector<1x128xf32>
    %c0_57 = arith.constant 0 : index
    %c0_58 = arith.constant 0 : index
    %141 = vector.load %arg13[%c0_57, %c0_58] : memref<1x128xf32, #tpu.memory_space<vmem>>, vector<1x128xf32>
    %cst_59 = arith.constant dense<0.000000e+00> : vector<16xf32>
    %142 = vector.multi_reduction <add>, %139, %cst_59 [1] : vector<16x128xf32> to vector<16xf32>
    %143 = vector.shape_cast %142 : vector<16xf32> to vector<16x1xf32>
    %cst_60 = arith.constant 1.280000e+02 : f32
    %144 = vector.broadcast %cst_60 : f32 to vector<16x1xf32>
    %145 = arith.divf %143, %144 : vector<16x1xf32>
    %146 = vector.broadcast %145 : vector<16x1xf32> to vector<16x128xf32>
    %147 = arith.subf %139, %146 : vector<16x128xf32>
    %148 = arith.mulf %147, %147 : vector<16x128xf32>
    %cst_61 = arith.constant dense<0.000000e+00> : vector<16xf32>
    %149 = vector.multi_reduction <add>, %148, %cst_61 [1] : vector<16x128xf32> to vector<16xf32>
    %150 = vector.shape_cast %149 : vector<16xf32> to vector<16x1xf32>
    %cst_62 = arith.constant 1.280000e+02 : f32
    %151 = vector.broadcast %cst_62 : f32 to vector<16x1xf32>
    %152 = arith.divf %150, %151 : vector<16x1xf32>
    %cst_63 = arith.constant 9.99999974E-6 : f32
    %153 = vector.broadcast %cst_63 : f32 to vector<16x1xf32>
    %154 = arith.addf %152, %153 : vector<16x1xf32>
    %155 = math.rsqrt %154 : vector<16x1xf32>
    %156 = vector.broadcast %155 : vector<16x1xf32> to vector<16x128xf32>
    %157 = arith.mulf %147, %156 : vector<16x128xf32>
    %158 = vector.broadcast %140 : vector<1x128xf32> to vector<16x128xf32>
    %159 = arith.mulf %157, %158 : vector<16x128xf32>
    %160 = vector.broadcast %141 : vector<1x128xf32> to vector<16x128xf32>
    %161 = arith.addf %159, %160 : vector<16x128xf32>
    %c0_64 = arith.constant 0 : index
    %c0_65 = arith.constant 0 : index
    %c0_66 = arith.constant 0 : index
    %162 = vector.load %arg14[%c0_64, %c0_65, %c0_66] : memref<1x16x128xf32, #tpu.memory_space<vmem>>, vector<1x16x128xf32>
    %163 = vector.shape_cast %162 : vector<1x16x128xf32> to vector<16x128xf32>
    %164 = vector.shape_cast %161 : vector<16x128xf32> to vector<1x16x128xf32>
    tpu.vector_store %arg14[%c0_64, %c0_65, %c0_66], %164 {strides = array<i32>} : memref<1x16x128xf32, #tpu.memory_space<vmem>>, vector<1x16x128xf32>,
    return
  }
  func.func @transform_0(%arg0: i32) -> (i32, i32, i32) {
    %c0_i32 = arith.constant 0 : i32
    %c0_i32_0 = arith.constant 0 : i32
    %c0_i32_1 = arith.constant 0 : i32
    return %arg0, %c0_i32, %c0_i32_0 : i32, i32, i32
  }
  func.func @transform_1(%arg0: i32) -> (i32, i32) {
    %c0_i32 = arith.constant 0 : i32
    %c0_i32_0 = arith.constant 0 : i32
    %c0_i32_1 = arith.constant 0 : i32
    return %c0_i32, %c0_i32_0 : i32, i32
  }
  func.func @transform_2(%arg0: i32) -> (i32, i32) {
    %c0_i32 = arith.constant 0 : i32
    %c0_i32_0 = arith.constant 0 : i32
    %c0_i32_1 = arith.constant 0 : i32
    return %c0_i32, %c0_i32_0 : i32, i32
  }
  func.func @transform_3(%arg0: i32) -> (i32, i32) {
    %c0_i32 = arith.constant 0 : i32
    %c0_i32_0 = arith.constant 0 : i32
    %c0_i32_1 = arith.constant 0 : i32
    return %c0_i32, %c0_i32_0 : i32, i32
  }
  func.func @transform_4(%arg0: i32) -> (i32, i32) {
    %c0_i32 = arith.constant 0 : i32
    %c0_i32_0 = arith.constant 0 : i32
    %c0_i32_1 = arith.constant 0 : i32
    return %c0_i32, %c0_i32_0 : i32, i32
  }
  func.func @transform_5(%arg0: i32) -> (i32, i32) {
    %c0_i32 = arith.constant 0 : i32
    %c0_i32_0 = arith.constant 0 : i32
    %c0_i32_1 = arith.constant 0 : i32
    return %c0_i32, %c0_i32_0 : i32, i32
  }
  func.func @transform_6(%arg0: i32) -> (i32, i32) {
    %c0_i32 = arith.constant 0 : i32
    %c0_i32_0 = arith.constant 0 : i32
    %c0_i32_1 = arith.constant 0 : i32
    return %c0_i32, %c0_i32_0 : i32, i32
  }
  func.func @transform_7(%arg0: i32) -> (i32, i32) {
    %c0_i32 = arith.constant 0 : i32
    %c0_i32_0 = arith.constant 0 : i32
    %c0_i32_1 = arith.constant 0 : i32
    return %c0_i32, %c0_i32_0 : i32, i32
  }
  func.func @transform_8(%arg0: i32) -> (i32, i32) {
    %c0_i32 = arith.constant 0 : i32
    %c0_i32_0 = arith.constant 0 : i32
    %c0_i32_1 = arith.constant 0 : i32
    return %c0_i32, %c0_i32_0 : i32, i32
  }
  func.func @transform_9(%arg0: i32) -> (i32, i32) {
    %c0_i32 = arith.constant 0 : i32
    %c0_i32_0 = arith.constant 0 : i32
    %c0_i32_1 = arith.constant 0 : i32
    return %c0_i32, %c0_i32_0 : i32, i32
  }
  func.func @transform_10(%arg0: i32) -> (i32, i32) {
    %c0_i32 = arith.constant 0 : i32
    %c0_i32_0 = arith.constant 0 : i32
    %c0_i32_1 = arith.constant 0 : i32
    return %c0_i32, %c0_i32_0 : i32, i32
  }
  func.func @transform_11(%arg0: i32) -> (i32, i32) {
    %c0_i32 = arith.constant 0 : i32
    %c0_i32_0 = arith.constant 0 : i32
    %c0_i32_1 = arith.constant 0 : i32
    return %c0_i32, %c0_i32_0 : i32, i32
  }
  func.func @transform_12(%arg0: i32) -> (i32, i32) {
    %c0_i32 = arith.constant 0 : i32
    %c0_i32_0 = arith.constant 0 : i32
    %c0_i32_1 = arith.constant 0 : i32
    return %c0_i32, %c0_i32_0 : i32, i32
  }
  func.func @transform_13(%arg0: i32) -> (i32, i32, i32) {
    %c0_i32 = arith.constant 0 : i32
    %c0_i32_0 = arith.constant 0 : i32
    %c0_i32_1 = arith.constant 0 : i32
    return %arg0, %c0_i32, %c0_i32_0 : i32, i32, i32
  }
}

</mosaic_0001>

<llo_original>
// kernel: swin_block_forward.1
$region0: #{swin_block_forward.1}
  #allocation0 [shape = 'u32[]', space=smem, size = 0x4, offset = 0x4, fixed_abs, tag = 'smem constant byte address 0x4 - core index']
  #allocation1 [shape = 'u32[144,128]{1,0:T(1,128)}', space=vmem, size = 0x12000, scoped, tag = 'internal scratch']
  %s0 = inlined_call_operand.vmem [shape: f32[2,16,128], index: 0, kind: input, shape index: {}]
  %s1 = inlined_call_operand.vmem [shape: bf16[128,384], index: 1, kind: input, shape index: {}]
  %s2 = inlined_call_operand.vmem [shape: f32[1,384], index: 2, kind: input, shape index: {}]
  %s3 = inlined_call_operand.vmem [shape: bf16[128,128], index: 3, kind: input, shape index: {}]
  %s4 = inlined_call_operand.vmem [shape: f32[1,128], index: 4, kind: input, shape index: {}]
  %s5 = inlined_call_operand.vmem [shape: f32[1,128], index: 5, kind: input, shape index: {}]
  %s6 = inlined_call_operand.vmem [shape: f32[1,128], index: 6, kind: input, shape index: {}]
  %s7 = inlined_call_operand.vmem [shape: bf16[128,128], index: 7, kind: input, shape index: {}]
  %s8 = inlined_call_operand.vmem [shape: f32[1,128], index: 8, kind: input, shape index: {}]
  %s9 = inlined_call_operand.vmem [shape: bf16[128,128], index: 9, kind: input, shape index: {}]
  %s10 = inlined_call_operand.vmem [shape: f32[1,128], index: 10, kind: input, shape index: {}]
  %s11 = inlined_call_operand.vmem [shape: f32[1,128], index: 11, kind: input, shape index: {}]
  %s12 = inlined_call_operand.vmem [shape: f32[1,128], index: 12, kind: input, shape index: {}]
  %s13 = inlined_call_operand.hbm [shape: f32[2,16,128], index: 13, kind: output, shape index: {}]
  %s14 = sld [smem:[#allocation0]]
  $region85: #{swin_block_forward.1} parent=0
    _
  %s16 = ssub.s32 1, %s14
  %s17 = scalar_select 0, %s16, %s14
  $region1: #{swin_block_forward.1} parent=0
    #allocation2 [shape = 'u8[16384]{0}', space=vmem, size = 0x4000, scoped, tag = 'output window, operand 0']
    #allocation3 [shape = 's32[2]{0}', space=sflag, size = 0x8, scoped, tag = 'scoped memory for swin_block_forward.1']
    %18 = vsyncpa [#allocation3], 0
    %s19 = scalar_lea.sflag [#allocation3], 1
    %20 = vsyncpa %s19, 0
    loop: start=0, step=1, limit=4
    $region2: #{swin_block_forward.1} parent=1 // loop_pre_header
      _
    $region3: #{swin_block_forward.1} parent=1 // loop_header
      %s22 = sphi 0, %s26
      %p23 = scmp.ge.s32.totalorder %s22, 4
      %s32 = sphi 0, %s34
      %s35 = sphi 0, %s32
      %s36 = sphi 0, %s35
      %s52 = sphi 0, %s36
      %s56 = sphi 0, %s56
      %s58 = sphi 0, %s56
      %s59 = sphi 0, %s58
      %s73 = sphi 0, %s59
      %s77 = sphi 0, %s77
      %s79 = sphi 0, %s77
      %s80 = sphi 0, %s79
      %s94 = sphi 0, %s80
      %s98 = sphi 0, %s98
      %s100 = sphi 0, %s98
      %s101 = sphi 0, %s100
      %s115 = sphi 0, %s101
      %s119 = sphi 0, %s119
      %s121 = sphi 0, %s119
      %s122 = sphi 0, %s121
      %s136 = sphi 0, %s122
      %s140 = sphi 0, %s140
      %s142 = sphi 0, %s140
      %s143 = sphi 0, %s142
      %s157 = sphi 0, %s143
      %s161 = sphi 0, %s161
      %s163 = sphi 0, %s161
      %s164 = sphi 0, %s163
      %s178 = sphi 0, %s164
      %s182 = sphi 0, %s182
      %s184 = sphi 0, %s182
      %s185 = sphi 0, %s184
      %s199 = sphi 0, %s185
      %s203 = sphi 0, %s203
      %s205 = sphi 0, %s203
      %s206 = sphi 0, %s205
      %s220 = sphi 0, %s206
      %s224 = sphi 0, %s224
      %s226 = sphi 0, %s224
      %s227 = sphi 0, %s226
      %s241 = sphi 0, %s227
      %s245 = sphi 0, %s245
      %s247 = sphi 0, %s245
      %s248 = sphi 0, %s247
      %s262 = sphi 0, %s248
      %s266 = sphi 0, %s266
      %s268 = sphi 0, %s266
      %s269 = sphi 0, %s268
      %s283 = sphi 0, %s269
      %s287 = sphi 0, %s287
      %s289 = sphi 0, %s287
      %s290 = sphi 0, %s289
      %s304 = sphi 0, %s290
      %s310 = sphi 0, %s312
      %s313 = sphi 0, %s310
      %s314 = sphi 0, %s313
      %s330 = sphi 0, %s314
    $region4: #{swin_block_forward.1} parent=1 // loop_header_branch
      %25 = sbr.rel (%p23) target = $region8
    $region5: #{swin_block_forward.1} parent=1 // loop_body
      %s27 = ssub.s32 %s22, 1
      %s28 = ssub.s32 %s22, 2
      %s29 = sadd.s32 %s22, 1
      %s30 = ssub.s32 %s22, %s29
      %p31 = scmp.eq.s32.totalorder %s30, 0
      %s33 = sadd.s32 %s32, 1
      %s34 = scalar_select %p31, %s32, %s33
      %p37 = pneg %p31
      %p38 = scmp.eq.s32.totalorder %s22, 1
      %p39 = por %p37, %p38
      %p40 = scmp.ne.s32.totalorder %s32, %s35
      %p41 = scmp.eq.s32.totalorder %s22, 0
      %p42 = por %p40, %p41
      %p43 = scmp.ne.s32.totalorder %s32, %s35
      %p44 = scmp.eq.s32.totalorder %s27, 1
      %p45 = por %p43, %p44
      %p46 = scmp.ne.s32.totalorder %s35, %s36
      %p47 = scmp.eq.s32.totalorder %s27, 0
      %p48 = por %p46, %p47
      %p49 = scmp.ne.s32.totalorder %s35, %s36
      %p50 = scmp.eq.s32.totalorder %s28, 1
      %p51 = por %p49, %p50
      %p53 = scmp.ne.s32.totalorder %s36, %s52
      %p54 = scmp.eq.s32.totalorder %s28, 0
      %p55 = por %p53, %p54
      %s57 = sadd.s32 %s56, 1
      %p60 = scmp.eq.s32.totalorder %s22, 1
      %p61 = scmp.ne.s32.totalorder %s56, %s58
      %p62 = scmp.eq.s32.totalorder %s22, 0
      %p63 = por %p61, %p62
      %p64 = scmp.ne.s32.totalorder %s56, %s58
      %p65 = scmp.eq.s32.totalorder %s27, 1
      %p66 = por %p64, %p65
      %p67 = scmp.ne.s32.totalorder %s58, %s59
      %p68 = scmp.eq.s32.totalorder %s27, 0
      %p69 = por %p67, %p68
      %p70 = scmp.ne.s32.totalorder %s58, %s59
      %p71 = scmp.eq.s32.totalorder %s28, 1
      %p72 = por %p70, %p71
      %p74 = scmp.ne.s32.totalorder %s59, %s73
      %p75 = scmp.eq.s32.totalorder %s28, 0
      %p76 = por %p74, %p75
      %s78 = sadd.s32 %s77, 1
      %p81 = scmp.eq.s32.totalorder %s22, 1
      %p82 = scmp.ne.s32.totalorder %s77, %s79
      %p83 = scmp.eq.s32.totalorder %s22, 0
      %p84 = por %p82, %p83
      %p85 = scmp.ne.s32.totalorder %s77, %s79
      %p86 = scmp.eq.s32.totalorder %s27, 1
      %p87 = por %p85, %p86
      %p88 = scmp.ne.s32.totalorder %s79, %s80
      %p89 = scmp.eq.s32.totalorder %s27, 0
      %p90 = por %p88, %p89
      %p91 = scmp.ne.s32.totalorder %s79, %s80
      %p92 = scmp.eq.s32.totalorder %s28, 1
      %p93 = por %p91, %p92
      %p95 = scmp.ne.s32.totalorder %s80, %s94
      %p96 = scmp.eq.s32.totalorder %s28, 0
      %p97 = por %p95, %p96
      %s99 = sadd.s32 %s98, 1
      %p102 = scmp.eq.s32.totalorder %s22, 1
      %p103 = scmp.ne.s32.totalorder %s98, %s100
      %p104 = scmp.eq.s32.totalorder %s22, 0
      %p105 = por %p103, %p104
      %p106 = scmp.ne.s32.totalorder %s98, %s100
      %p107 = scmp.eq.s32.totalorder %s27, 1
      %p108 = por %p106, %p107
      %p109 = scmp.ne.s32.totalorder %s100, %s101
      %p110 = scmp.eq.s32.totalorder %s27, 0
      %p111 = por %p109, %p110
      %p112 = scmp.ne.s32.totalorder %s100, %s101
      %p113 = scmp.eq.s32.totalorder %s28, 1
      %p114 = por %p112, %p113
      %p116 = scmp.ne.s32.totalorder %s101, %s115
      %p117 = scmp.eq.s32.totalorder %s28, 0
      %p118 = por %p116, %p117
      %s120 = sadd.s32 %s119, 1
      %p123 = scmp.eq.s32.totalorder %s22, 1
      %p124 = scmp.ne.s32.totalorder %s119, %s121
      %p125 = scmp.eq.s32.totalorder %s22, 0
      %p126 = por %p124, %p125
      %p127 = scmp.ne.s32.totalorder %s119, %s121
      %p128 = scmp.eq.s32.totalorder %s27, 1
      %p129 = por %p127, %p128
      %p130 = scmp.ne.s32.totalorder %s121, %s122
      %p131 = scmp.eq.s32.totalorder %s27, 0
      %p132 = por %p130, %p131
      %p133 = scmp.ne.s32.totalorder %s121, %s122
      %p134 = scmp.eq.s32.totalorder %s28, 1
      %p135 = por %p133, %p134
      %p137 = scmp.ne.s32.totalorder %s122, %s136
      %p138 = scmp.eq.s32.totalorder %s28, 0
      %p139 = por %p137, %p138
      %s141 = sadd.s32 %s140, 1
      %p144 = scmp.eq.s32.totalorder %s22, 1
      %p145 = scmp.ne.s32.totalorder %s140, %s142
      %p146 = scmp.eq.s32.totalorder %s22, 0
      %p147 = por %p145, %p146
      %p148 = scmp.ne.s32.totalorder %s140, %s142
      %p149 = scmp.eq.s32.totalorder %s27, 1
      %p150 = por %p148, %p149
      %p151 = scmp.ne.s32.totalorder %s142, %s143
      %p152 = scmp.eq.s32.totalorder %s27, 0
      %p153 = por %p151, %p152
      %p154 = scmp.ne.s32.totalorder %s142, %s143
      %p155 = scmp.eq.s32.totalorder %s28, 1
      %p156 = por %p154, %p155
      %p158 = scmp.ne.s32.totalorder %s143, %s157
      %p159 = scmp.eq.s32.totalorder %s28, 0
      %p160 = por %p158, %p159
      %s162 = sadd.s32 %s161, 1
      %p165 = scmp.eq.s32.totalorder %s22, 1
      %p166 = scmp.ne.s32.totalorder %s161, %s163
      %p167 = scmp.eq.s32.totalorder %s22, 0
      %p168 = por %p166, %p167
      %p169 = scmp.ne.s32.totalorder %s161, %s163
      %p170 = scmp.eq.s32.totalorder %s27, 1
      %p171 = por %p169, %p170
      %p172 = scmp.ne.s32.totalorder %s163, %s164
      %p173 = scmp.eq.s32.totalorder %s27, 0
      %p174 = por %p172, %p173
      %p175 = scmp.ne.s32.totalorder %s163, %s164
      %p176 = scmp.eq.s32.totalorder %s28, 1
      %p177 = por %p175, %p176
      %p179 = scmp.ne.s32.totalorder %s164, %s178
      %p180 = scmp.eq.s32.totalorder %s28, 0
      %p181 = por %p179, %p180
      %s183 = sadd.s32 %s182, 1
      %p186 = scmp.eq.s32.totalorder %s22, 1
      %p187 = scmp.ne.s32.totalorder %s182, %s184
      %p188 = scmp.eq.s32.totalorder %s22, 0
      %p189 = por %p187, %p188
      %p190 = scmp.ne.s32.totalorder %s182, %s184
      %p191 = scmp.eq.s32.totalorder %s27, 1
      %p192 = por %p190, %p191
      %p193 = scmp.ne.s32.totalorder %s184, %s185
      %p194 = scmp.eq.s32.totalorder %s27, 0
      %p195 = por %p193, %p194
      %p196 = scmp.ne.s32.totalorder %s184, %s185
      %p197 = scmp.eq.s32.totalorder %s28, 1
      %p198 = por %p196, %p197
      %p200 = scmp.ne.s32.totalorder %s185, %s199
      %p201 = scmp.eq.s32.totalorder %s28, 0
      %p202 = por %p200, %p201
      %s204 = sadd.s32 %s203, 1
      %p207 = scmp.eq.s32.totalorder %s22, 1
      %p208 = scmp.ne.s32.totalorder %s203, %s205
      %p209 = scmp.eq.s32.totalorder %s22, 0
      %p210 = por %p208, %p209
      %p211 = scmp.ne.s32.totalorder %s203, %s205
      %p212 = scmp.eq.s32.totalorder %s27, 1
      %p213 = por %p211, %p212
      %p214 = scmp.ne.s32.totalorder %s205, %s206
      %p215 = scmp.eq.s32.totalorder %s27, 0
      %p216 = por %p214, %p215
      %p217 = scmp.ne.s32.totalorder %s205, %s206
      %p218 = scmp.eq.s32.totalorder %s28, 1
      %p219 = por %p217, %p218
      %p221 = scmp.ne.s32.totalorder %s206, %s220
      %p222 = scmp.eq.s32.totalorder %s28, 0
      %p223 = por %p221, %p222
      %s225 = sadd.s32 %s224, 1
      %p228 = scmp.eq.s32.totalorder %s22, 1
      %p229 = scmp.ne.s32.totalorder %s224, %s226
      %p230 = scmp.eq.s32.totalorder %s22, 0
      %p231 = por %p229, %p230
      %p232 = scmp.ne.s32.totalorder %s224, %s226
      %p233 = scmp.eq.s32.totalorder %s27, 1
      %p234 = por %p232, %p233
      %p235 = scmp.ne.s32.totalorder %s226, %s227
      %p236 = scmp.eq.s32.totalorder %s27, 0
      %p237 = por %p235, %p236
      %p238 = scmp.ne.s32.totalorder %s226, %s227
      %p239 = scmp.eq.s32.totalorder %s28, 1
      %p240 = por %p238, %p239
      %p242 = scmp.ne.s32.totalorder %s227, %s241
      %p243 = scmp.eq.s32.totalorder %s28, 0
      %p244 = por %p242, %p243
      %s246 = sadd.s32 %s245, 1
      %p249 = scmp.eq.s32.totalorder %s22, 1
      %p250 = scmp.ne.s32.totalorder %s245, %s247
      %p251 = scmp.eq.s32.totalorder %s22, 0
      %p252 = por %p250, %p251
      %p253 = scmp.ne.s32.totalorder %s245, %s247
      %p254 = scmp.eq.s32.totalorder %s27, 1
      %p255 = por %p253, %p254
      %p256 = scmp.ne.s32.totalorder %s247, %s248
      %p257 = scmp.eq.s32.totalorder %s27, 0
      %p258 = por %p256, %p257
      %p259 = scmp.ne.s32.totalorder %s247, %s248
      %p260 = scmp.eq.s32.totalorder %s28, 1
      %p261 = por %p259, %p260
      %p263 = scmp.ne.s32.totalorder %s248, %s262
      %p264 = scmp.eq.s32.totalorder %s28, 0
      %p265 = por %p263, %p264
      %s267 = sadd.s32 %s266, 1
      %p270 = scmp.eq.s32.totalorder %s22, 1
      %p271 = scmp.ne.s32.totalorder %s266, %s268
      %p272 = scmp.eq.s32.totalorder %s22, 0
      %p273 = por %p271, %p272
      %p274 = scmp.ne.s32.totalorder %s266, %s268
      %p275 = scmp.eq.s32.totalorder %s27, 1
      %p276 = por %p274, %p275
      %p277 = scmp.ne.s32.totalorder %s268, %s269
      %p278 = scmp.eq.s32.totalorder %s27, 0
      %p279 = por %p277, %p278
      %p280 = scmp.ne.s32.totalorder %s268, %s269
      %p281 = scmp.eq.s32.totalorder %s28, 1
      %p282 = por %p280, %p281
      %p284 = scmp.ne.s32.totalorder %s269, %s283
      %p285 = scmp.eq.s32.totalorder %s28, 0
      %p286 = por %p284, %p285
      %s288 = sadd.s32 %s287, 1
      %p291 = scmp.eq.s32.totalorder %s22, 1
      %p292 = scmp.ne.s32.totalorder %s287, %s289
      %p293 = scmp.eq.s32.totalorder %s22, 0
      %p294 = por %p292, %p293
      %p295 = scmp.ne.s32.totalorder %s287, %s289
      %p296 = scmp.eq.s32.totalorder %s27, 1
      %p297 = por %p295, %p296
      %p298 = scmp.ne.s32.totalorder %s289, %s290
      %p299 = scmp.eq.s32.totalorder %s27, 0
      %p300 = por %p298, %p299
      %p301 = scmp.ne.s32.totalorder %s289, %s290
      %p302 = scmp.eq.s32.totalorder %s28, 1
      %p303 = por %p301, %p302
      %p305 = scmp.ne.s32.totalorder %s290, %s304
      %p306 = scmp.eq.s32.totalorder %s28, 0
      %p307 = por %p305, %p306
      %s308 = ssub.s32 %s22, %s29
      %p309 = scmp.eq.s32.totalorder %s308, 0
      %s311 = sadd.s32 %s310, 1
      %s312 = scalar_select %p309, %s310, %s311
      %p315 = pneg %p309
      %p316 = scmp.eq.s32.totalorder %s22, 1
      %p317 = por %p315, %p316
      %p318 = scmp.ne.s32.totalorder %s310, %s313
      %p319 = scmp.eq.s32.totalorder %s22, 0
      %p320 = por %p318, %p319
      %p321 = scmp.ne.s32.totalorder %s310, %s313
      %p322 = scmp.eq.s32.totalorder %s27, 1
      %p323 = por %p321, %p322
      %p324 = scmp.ne.s32.totalorder %s313, %s314
      %p325 = scmp.eq.s32.totalorder %s27, 0
      %p326 = por %p324, %p325
      %p327 = scmp.ne.s32.totalorder %s313, %s314
      %p328 = scmp.eq.s32.totalorder %s28, 1
      %p329 = por %p327, %p328
      %p331 = scmp.ne.s32.totalorder %s314, %s330
      %p332 = scmp.eq.s32.totalorder %s28, 0
      %p333 = por %p331, %p332
      %p334 = scmp.le.s32.totalorder 1, %s22
      %p335 = scmp.lt.s32.totalorder %s22, 3
      %p336 = pnand %p334, %p335
      %p337 = pneg %p336
      // Predicated region
      $region9: #{swin_block_forward.1} parent=5 // pred_check
        _
      $region10: #{swin_block_forward.1} parent=5 // pred_check_branch
        %339 = sbr.rel (%p336) target = $region12
      $region11: #{swin_block_forward.1} parent=5 // pred_region
        %s340 = ssub.s32 %s22, 1
        // Predicated region
        $region13: #{swin_block_forward.1} parent=11 // pred_check
          %p341 = pneg %p69
        $region14: #{swin_block_forward.1} parent=11 // pred_check_branch
          %343 = sbr.rel (%p341) target = $region16
        $region15: #{swin_block_forward.1} parent=11 // pred_region
          _
        $region16: #{swin_block_forward.1} parent=11 // pred_fallthru
          _
        // Predicated region
        $region17: #{swin_block_forward.1} parent=11 // pred_check
          %p344 = pneg %p90
        $region18: #{swin_block_forward.1} parent=11 // pred_check_branch
          %346 = sbr.rel (%p344) target = $region20
        $region19: #{swin_block_forward.1} parent=11 // pred_region
          _
        $region20: #{swin_block_forward.1} parent=11 // pred_fallthru
          _
        // Predicated region
        $region21: #{swin_block_forward.1} parent=11 // pred_check
          %p347 = pneg %p111
        $region22: #{swin_block_forward.1} parent=11 // pred_check_branch
          %349 = sbr.rel (%p347) target = $region24
        $region23: #{swin_block_forward.1} parent=11 // pred_region
          _
        $region24: #{swin_block_forward.1} parent=11 // pred_fallthru
          _
        // Predicated region
        $region25: #{swin_block_forward.1} parent=11 // pred_check
          %p350 = pneg %p132
        $region26: #{swin_block_forward.1} parent=11 // pred_check_branch
          %352 = sbr.rel (%p350) target = $region28
        $region27: #{swin_block_forward.1} parent=11 // pred_region
          _
        $region28: #{swin_block_forward.1} parent=11 // pred_fallthru
          _
        // Predicated region
        $region29: #{swin_block_forward.1} parent=11 // pred_check
          %p353 = pneg %p153
        $region30: #{swin_block_forward.1} parent=11 // pred_check_branch
          %355 = sbr.rel (%p353) target = $region32
        $region31: #{swin_block_forward.1} parent=11 // pred_region
          _
        $region32: #{swin_block_forward.1} parent=11 // pred_fallthru
          _
        // Predicated region
        $region33: #{swin_block_forward.1} parent=11 // pred_check
          %p356 = pneg %p174
        $region34: #{swin_block_forward.1} parent=11 // pred_check_branch
          %358 = sbr.rel (%p356) target = $region36
        $region35: #{swin_block_forward.1} parent=11 // pred_region
          _
        $region36: #{swin_block_forward.1} parent=11 // pred_fallthru
          _
        // Predicated region
        $region37: #{swin_block_forward.1} parent=11 // pred_check
          %p359 = pneg %p195
        $region38: #{swin_block_forward.1} parent=11 // pred_check_branch
          %361 = sbr.rel (%p359) target = $region40
        $region39: #{swin_block_forward.1} parent=11 // pred_region
          _
        $region40: #{swin_block_forward.1} parent=11 // pred_fallthru
          _
        // Predicated region
        $region41: #{swin_block_forward.1} parent=11 // pred_check
          %p362 = pneg %p216
        $region42: #{swin_block_forward.1} parent=11 // pred_check_branch
          %364 = sbr.rel (%p362) target = $region44
        $region43: #{swin_block_forward.1} parent=11 // pred_region
          _
        $region44: #{swin_block_forward.1} parent=11 // pred_fallthru
          _
        // Predicated region
        $region45: #{swin_block_forward.1} parent=11 // pred_check
          %p365 = pneg %p237
        $region46: #{swin_block_forward.1} parent=11 // pred_check_branch
          %367 = sbr.rel (%p365) target = $region48
        $region47: #{swin_block_forward.1} parent=11 // pred_region
          _
        $region48: #{swin_block_forward.1} parent=11 // pred_fallthru
          _
        // Predicated region
        $region49: #{swin_block_forward.1} parent=11 // pred_check
          %p368 = pneg %p258
        $region50: #{swin_block_forward.1} parent=11 // pred_check_branch
          %370 = sbr.rel (%p368) target = $region52
        $region51: #{swin_block_forward.1} parent=11 // pred_region
          _
        $region52: #{swin_block_forward.1} parent=11 // pred_fallthru
          _
        // Predicated region
        $region53: #{swin_block_forward.1} parent=11 // pred_check
          %p371 = pneg %p279
        $region54: #{swin_block_forward.1} parent=11 // pred_check_branch
          %373 = sbr.rel (%p371) target = $region56
        $region55: #{swin_block_forward.1} parent=11 // pred_region
          _
        $region56: #{swin_block_forward.1} parent=11 // pred_fallthru
          _
        // Predicated region
        $region57: #{swin_block_forward.1} parent=11 // pred_check
          %p374 = pneg %p300
        $region58: #{swin_block_forward.1} parent=11 // pred_check_branch
          %376 = sbr.rel (%p374) target = $region60
        $region59: #{swin_block_forward.1} parent=11 // pred_region
          _
        $region60: #{swin_block_forward.1} parent=11 // pred_fallthru
          _
      $region12: #{swin_block_forward.1} parent=5 // pred_fallthru
        _
      %p377 = scmp.lt.s32.totalorder %s22, 2
      // Predicated region
      $region61: #{swin_block_forward.1} parent=5 // pred_check
        %p378 = pneg %p377
      $region62: #{swin_block_forward.1} parent=5 // pred_check_branch
        %380 = sbr.rel (%p378) target = $region64
      $region63: #{swin_block_forward.1} parent=5 // pred_region
        // Predicated region
        $region65: #{swin_block_forward.1} parent=63 // pred_check
          %p381 = pneg %p42
        $region66: #{swin_block_forward.1} parent=63 // pred_check_branch
          %383 = sbr.rel (%p381) target = $region68
        $region67: #{swin_block_forward.1} parent=63 // pred_region
          %p384 = scmp.lt.s32.totalorder %s22, 1
          %s385 = scalar_select %p384, %s22, 1
          %s386 = smul.addr %s385, 2
          %s387 = smul.addr %s386, 8
          %s388 = scalar_lea.vmem %s0, %s387
        $region68: #{swin_block_forward.1} parent=63 // pred_fallthru
          _
      $region64: #{swin_block_forward.1} parent=5 // pred_fallthru
        _
      %p389 = scmp.le.s32.totalorder 1, %s22
      %p390 = scmp.lt.s32.totalorder %s22, 3
      %p391 = pnand %p389, %p390
      %p392 = pneg %p391
      // Predicated region
      $region69: #{swin_block_forward.1} parent=5 // pred_check
        _
      $region70: #{swin_block_forward.1} parent=5 // pred_check_branch
        %394 = sbr.rel (%p391) target = $region72
      $region71: #{swin_block_forward.1} parent=5 // pred_region
        %s395 = ssub.s32 %s22, 1
        %p396 = scmp.lt.s32.totalorder %s27, 1
        %s397 = scalar_select %p396, %s27, 1
        %s398 = smul.addr %s397, 2
        %s399 = smul.addr %s398, 8
        %s400 = scalar_lea.vmem %s0, %s399
        %p401 = pneg %p48
        %p402 = pneg %p45
        %p403 = pneg %p69
        %p404 = pneg %p66
        %p405 = pneg %p90
        %p406 = pneg %p87
        %p407 = pneg %p111
        %p408 = pneg %p108
        %p409 = pneg %p132
        %p410 = pneg %p129
        %p411 = pneg %p153
        %p412 = pneg %p150
        %p413 = pneg %p174
        %p414 = pneg %p171
        %p415 = pneg %p195
        %p416 = pneg %p192
        %p417 = pneg %p216
        %p418 = pneg %p213
        %p419 = pneg %p237
        %p420 = pneg %p234
        %p421 = pneg %p258
        %p422 = pneg %p255
        %p423 = pneg %p279
        %p424 = pneg %p276
        %p425 = pneg %p300
        %p426 = pneg %p297
        %p427 = pneg %p326
        %p428 = pneg %p323
        %s429 = sand.u32 %s313, 1
        %s430 = scalar_lea.sflag [#allocation3], %s429
        %s431 = sand.u32 %s313, 1
        %s432 = smul.addr %s431, 16
        %s433 = scalar_lea.vmem [#allocation2], %s432
        %p434 = scmp.lt.s32.totalorder %s27, 1
        %s435 = scalar_select %p434, %s27, 1
        %s436 = smul.addr %s435, 2
        %s437 = smul.addr %s436, 8
        %s438 = scalar_lea.vmem %s0, %s437
        %v440 = vld [vmem:[%s438] sm:$0xff]
        %v441 = vld [vmem:[%s438 + $0x8] sm:$0xff]
        %v442 = vpack.c.bf16 %v441, %v440
        %v443 = vld [vmem:[%s1] sm:$0xff]
        %v444 = vld [vmem:[%s1 + $0x8] sm:$0xf]
        %v445 = vld [vmem:[%s1 + $0xc] sm:$0xff]
        %v446 = vld [vmem:[%s1 + $0x14] sm:$0xf]
        %v447 = vld [vmem:[%s1 + $0x18] sm:$0xff]
        %v448 = vld [vmem:[%s1 + $0x20] sm:$0xf]
        %v449 = vld [vmem:[%s1 + $0x24] sm:$0xff]
        %v450 = vld [vmem:[%s1 + $0x2c] sm:$0xf]
        %v451 = vld [vmem:[%s1 + $0x30] sm:$0xff]
        %v452 = vld [vmem:[%s1 + $0x38] sm:$0xf]
        %v453 = vld [vmem:[%s1 + $0x3c] sm:$0xff]
        %v454 = vld [vmem:[%s1 + $0x44] sm:$0xf]
        %v455 = vld [vmem:[%s1 + $0x48] sm:$0xff]
        %v456 = vld [vmem:[%s1 + $0x50] sm:$0xf]
        %v457 = vld [vmem:[%s1 + $0x54] sm:$0xff]
        %v458 = vld [vmem:[%s1 + $0x5c] sm:$0xf]
        %v459 = vld [vmem:[%s1 + $0x60] sm:$0xff]
        %v460 = vld [vmem:[%s1 + $0x68] sm:$0xf]
        %v461 = vld [vmem:[%s1 + $0x6c] sm:$0xff]
        %v462 = vld [vmem:[%s1 + $0x74] sm:$0xf]
        %v463 = vld [vmem:[%s1 + $0x78] sm:$0xff]
        %v464 = vld [vmem:[%s1 + $0x80] sm:$0xf]
        %v465 = vld [vmem:[%s1 + $0x84] sm:$0xff]
        %v466 = vld [vmem:[%s1 + $0x8c] sm:$0xf]
        %v467 = vld [vmem:[%s1 + $0x90] sm:$0xff]
        %v468 = vld [vmem:[%s1 + $0x98] sm:$0xf]
        %v469 = vld [vmem:[%s1 + $0x9c] sm:$0xff]
        %v470 = vld [vmem:[%s1 + $0xa4] sm:$0xf]
        %v471 = vld [vmem:[%s1 + $0xa8] sm:$0xff]
        %v472 = vld [vmem:[%s1 + $0xb0] sm:$0xf]
        %v473 = vld [vmem:[%s1 + $0xb4] sm:$0xff]
        %v474 = vld [vmem:[%s1 + $0xbc] sm:$0xf]
        %v475 = vld [vmem:[%s2] sm:$0x7]
        %v477 = vlaneseq
        %v478 = vshrl.u32 %v477, 7
        %v479 = vsub.s32 0, %v478
        %v480 = vrot.slane %v475, %v479
        %v481 = vlaneseq
        %v482 = vshrl.u32 %v481, 7
        %v483 = vsub.s32 1, %v482
        %v484 = vrot.slane %v475, %v483
        %v485 = vlaneseq
        %v486 = vshrl.u32 %v485, 7
        %v487 = vsub.s32 2, %v486
        %v488 = vrot.slane %v475, %v487
        %v524 = vunpack.c.l.b16 %v443
        %v525 = vunpack.c.h.b16 %v443
        %v526 = vunpack.c.l.b16 %v444
        %v527 = vunpack.c.l.b16 %v445
        %v528 = vunpack.c.h.b16 %v445
        %v529 = vunpack.c.l.b16 %v446
        %v530 = vunpack.c.l.b16 %v447
        %v531 = vunpack.c.h.b16 %v447
        %v532 = vunpack.c.l.b16 %v448
        %v533 = vunpack.c.l.b16 %v449
        %v534 = vunpack.c.h.b16 %v449
        %v535 = vunpack.c.l.b16 %v450
        %v536 = vunpack.c.l.b16 %v451
        %v537 = vunpack.c.h.b16 %v451
        %v538 = vunpack.c.l.b16 %v452
        %v539 = vunpack.c.l.b16 %v453
        %v540 = vunpack.c.h.b16 %v453
        %v541 = vunpack.c.l.b16 %v454
        %v542 = vunpack.c.l.b16 %v455
        %v543 = vunpack.c.h.b16 %v455
        %v544 = vunpack.c.l.b16 %v456
        %v545 = vunpack.c.l.b16 %v457
        %v546 = vunpack.c.h.b16 %v457
        %v547 = vunpack.c.l.b16 %v458
        %v548 = vunpack.c.l.b16 %v459
        %v549 = vunpack.c.h.b16 %v459
        %v550 = vunpack.c.l.b16 %v460
        %v551 = vunpack.c.l.b16 %v461
        %v552 = vunpack.c.h.b16 %v461
        %v553 = vunpack.c.l.b16 %v462
        %v554 = vunpack.c.l.b16 %v463
        %v555 = vunpack.c.h.b16 %v463
        %v556 = vunpack.c.l.b16 %v464
        %v557 = vunpack.c.l.b16 %v465
        %v558 = vunpack.c.h.b16 %v465
        %v559 = vunpack.c.l.b16 %v466
        %v560 = vunpack.c.l.b16 %v467
        %v561 = vunpack.c.h.b16 %v467
        %v562 = vunpack.c.l.b16 %v468
        %v563 = vunpack.c.l.b16 %v469
        %v564 = vunpack.c.h.b16 %v469
        %v565 = vunpack.c.l.b16 %v470
        %v566 = vunpack.c.l.b16 %v471
        %v567 = vunpack.c.h.b16 %v471
        %v568 = vunpack.c.l.b16 %v472
        %v569 = vunpack.c.l.b16 %v473
        %v570 = vunpack.c.h.b16 %v473
        %v571 = vunpack.c.l.b16 %v474
        %v572 = vpack.c.b16 %v527, %v524
        %v573 = vpack.c.b16 %v528, %v525
        %v574 = vpack.c.b16 %v529, %v526
        %v575 = vpack.c.b16 %v533, %v530
        %v576 = vpack.c.b16 %v534, %v531
        %v577 = vpack.c.b16 %v535, %v532
        %v578 = vpack.c.b16 %v539, %v536
        %v579 = vpack.c.b16 %v540, %v537
        %v580 = vpack.c.b16 %v541, %v538
        %v581 = vpack.c.b16 %v545, %v542
        %v582 = vpack.c.b16 %v546, %v543
        %v583 = vpack.c.b16 %v547, %v544
        %v584 = vpack.c.b16 %v551, %v548
        %v585 = vpack.c.b16 %v552, %v549
        %v586 = vpack.c.b16 %v553, %v550
        %v587 = vpack.c.b16 %v557, %v554
        %v588 = vpack.c.b16 %v558, %v555
        %v589 = vpack.c.b16 %v559, %v556
        %v590 = vpack.c.b16 %v563, %v560
        %v591 = vpack.c.b16 %v564, %v561
        %v592 = vpack.c.b16 %v565, %v562
        %v593 = vpack.c.b16 %v569, %v566
        %v594 = vpack.c.b16 %v570, %v567
        %v595 = vpack.c.b16 %v571, %v568
        %620 = vmatprep.subr.bf16.mxu0 %v573
        %621 = vmatpush1.bf16.msra.mxu0 %v572
        %622 = vmatprep.subr.bf16.mxu0 %v576
        %623 = vmatpush1.bf16.msra.mxu0 %v575
        %624 = vmatprep.subr.bf16.mxu0 %v579
        %625 = vmatpush1.bf16.msra.mxu0 %v578
        %626 = vmatprep.subr.bf16.mxu0 %v582
        %627 = vmatpush1.bf16.msra.mxu0 %v581
        %628 = vmatprep.subr.bf16.mxu0 %v585
        %629 = vmatpush1.bf16.msra.mxu0 %v584
        %630 = vmatprep.subr.bf16.mxu0 %v588
        %631 = vmatpush1.bf16.msra.mxu0 %v587
        %632 = vmatprep.subr.bf16.mxu0 %v591
        %633 = vmatpush1.bf16.msra.mxu0 %v590
        %634 = vmatprep.subr.bf16.mxu0 %v594
        %635 = vmatpush1.bf16.msra.mxu0 %v593
        %636 = vmatprep.subr.bf16.mxu0 0
        %637 = vmatpush1.bf16.msra.mxu0 0
        %638 = vmatprep.subr.bf16.mxu0 0
        %639 = vmatpush1.bf16.msra.mxu0 0
        %640 = vmatprep.subr.bf16.mxu0 0
        %641 = vmatpush1.bf16.msra.mxu0 0
        %642 = vmatprep.subr.bf16.mxu0 0
        %643 = vmatpush1.bf16.msra.mxu0 0
        %644 = vmatprep.subr.bf16.mxu0 0
        %645 = vmatpush1.bf16.msra.mxu0 0
        %646 = vmatprep.subr.bf16.mxu0 0
        %647 = vmatpush1.bf16.msra.mxu0 0
        %648 = vmatprep.subr.bf16.mxu0 0
        %649 = vmatpush1.bf16.msra.mxu0 0
        %650 = vmatprep.subr.bf16.mxu0 0
        %651 = vmatpush1.bf16.msra.mxu0 0
        %652 = vmatprep.mubr.bf16.mxu0 0
        %653 = vmatmul.mubr.bf16.gmra.mrb[0].mxu0 %v442
        %v654 = vpop.f32.mrb[0].mxu0
        %v655 = vadd.f32 %v480, %v654
        %v656 = vpop.f32.mrb[0].mxu0
        %v657 = vadd.f32 %v484, %v656
        %v658 = vpop.f32.mrb[0].mxu0
        %v659 = vadd.f32 %v480, %v658
        %v660 = vpop.f32.mrb[0].mxu0
        %v661 = vadd.f32 %v484, %v660
        %662 = vdwg.mxu0
        %663 = vmatprep.subr.bf16.mxu0 0
        %664 = vmatpush1.bf16.msra.mxu0 %v574
        %665 = vmatprep.subr.bf16.mxu0 0
        %666 = vmatpush1.bf16.msra.mxu0 %v577
        %667 = vmatprep.subr.bf16.mxu0 0
        %668 = vmatpush1.bf16.msra.mxu0 %v580
        %669 = vmatprep.subr.bf16.mxu0 0
        %670 = vmatpush1.bf16.msra.mxu0 %v583
        %671 = vmatprep.subr.bf16.mxu0 0
        %672 = vmatpush1.bf16.msra.mxu0 %v586
        %673 = vmatprep.subr.bf16.mxu0 0
        %674 = vmatpush1.bf16.msra.mxu0 %v589
        %675 = vmatprep.subr.bf16.mxu0 0
        %676 = vmatpush1.bf16.msra.mxu0 %v592
        %677 = vmatprep.subr.bf16.mxu0 0
        %678 = vmatpush1.bf16.msra.mxu0 %v595
        %679 = vmatprep.subr.bf16.mxu0 0
        %680 = vmatpush1.bf16.msra.mxu0 0
        %681 = vmatprep.subr.bf16.mxu0 0
        %682 = vmatpush1.bf16.msra.mxu0 0
        %683 = vmatprep.subr.bf16.mxu0 0
        %684 = vmatpush1.bf16.msra.mxu0 0
        %685 = vmatprep.subr.bf16.mxu0 0
        %686 = vmatpush1.bf16.msra.mxu0 0
        %687 = vmatprep.subr.bf16.mxu0 0
        %688 = vmatpush1.bf16.msra.mxu0 0
        %689 = vmatprep.subr.bf16.mxu0 0
        %690 = vmatpush1.bf16.msra.mxu0 0
        %691 = vmatprep.subr.bf16.mxu0 0
        %692 = vmatpush1.bf16.msra.mxu0 0
        %693 = vmatprep.subr.bf16.mxu0 0
        %694 = vmatpush1.bf16.msra.mxu0 0
        %695 = vmatprep.mubr.bf16.mxu0 0
        %696 = vmatmul.mubr.bf16.gmra.mrb[0].mxu0 %v442
        %v697 = vpop.f32.mrb[0].mxu0
        %v698 = vadd.f32 %v488, %v697
        %v699 = vpop.f32.mrb[0].mxu0
        %v700 = vpop.f32.mrb[0].mxu0
        %v701 = vadd.f32 %v488, %v700
        %v702 = vpop.f32.mrb[0].mxu0
        %703 = vdwg.mxu0
        %v704 = vpack.c.bf16 %v659, %v655
        %v705 = vpack.c.bf16 %v661, %v657
        %v706 = vpack.c.bf16 %v701, %v698
        %v707 = vld [vmem:[%s3] sm:$0xf]
        %v708 = vld [vmem:[%s3 + $0x4] sm:$0xf]
        %v709 = vld [vmem:[%s3 + $0x8] sm:$0xf]
        %v710 = vld [vmem:[%s3 + $0xc] sm:$0xf]
        %v711 = vld [vmem:[%s3 + $0x10] sm:$0xf]
        %v712 = vld [vmem:[%s3 + $0x14] sm:$0xf]
        %v713 = vld [vmem:[%s3 + $0x18] sm:$0xf]
        %v714 = vld [vmem:[%s3 + $0x1c] sm:$0xf]
        %v715 = vld [vmem:[%s3 + $0x20] sm:$0xf]
        %v716 = vld [vmem:[%s3 + $0x24] sm:$0xf]
        %v717 = vld [vmem:[%s3 + $0x28] sm:$0xf]
        %v718 = vld [vmem:[%s3 + $0x2c] sm:$0xf]
        %v719 = vld [vmem:[%s3 + $0x30] sm:$0xf]
        %v720 = vld [vmem:[%s3 + $0x34] sm:$0xf]
        %v721 = vld [vmem:[%s3 + $0x38] sm:$0xf]
        %v722 = vld [vmem:[%s3 + $0x3c] sm:$0xf]
        %vm723 = vcmask 261120
        %v725 = vsel %vm723, %v704, 0
        %v728 = vsel %vm723, %v705, 0
        %730 = vmatprep.subr.bf16.mxu0 0
        %731 = vmatpush1.bf16.xpose.msra.mxu0 %v728
        %732 = vmatprep.subr.bf16.mxu0 0
        %733 = vmatpush1.bf16.xpose.msra.mxu0 0
        %734 = vmatprep.subr.bf16.mxu0 0
        %735 = vmatpush1.bf16.xpose.msra.mxu0 0
        %736 = vmatprep.subr.bf16.mxu0 0
        %737 = vmatpush1.bf16.xpose.msra.mxu0 0
        %738 = vmatprep.subr.bf16.mxu0 0
        %739 = vmatpush1.bf16.xpose.msra.mxu0 0
        %740 = vmatprep.subr.bf16.mxu0 0
        %741 = vmatpush1.bf16.xpose.msra.mxu0 0
        %742 = vmatprep.subr.bf16.mxu0 0
        %743 = vmatpush1.bf16.xpose.msra.mxu0 0
        %744 = vmatprep.subr.bf16.mxu0 0
        %745 = vmatpush1.bf16.xpose.msra.mxu0 0
        %746 = vmatprep.subr.bf16.mxu0 0
        %747 = vmatpush1.bf16.xpose.msra.mxu0 0
        %748 = vmatprep.subr.bf16.mxu0 0
        %749 = vmatpush1.bf16.xpose.msra.mxu0 0
        %750 = vmatprep.subr.bf16.mxu0 0
        %751 = vmatpush1.bf16.xpose.msra.mxu0 0
        %752 = vmatprep.subr.bf16.mxu0 0
        %753 = vmatpush1.bf16.xpose.msra.mxu0 0
        %754 = vmatprep.subr.bf16.mxu0 0
        %755 = vmatpush1.bf16.xpose.msra.mxu0 0
        %756 = vmatprep.subr.bf16.mxu0 0
        %757 = vmatpush1.bf16.xpose.msra.mxu0 0
        %758 = vmatprep.subr.bf16.mxu0 0
        %759 = vmatpush1.bf16.xpose.msra.mxu0 0
        %760 = vmatprep.subr.bf16.mxu0 0
        %761 = vmatpush1.bf16.xpose.msra.mxu0 0
        %762 = vmatprep.mubr.bf16.mxu0 0
        %763 = vmatmul.mubr.bf16.gmra.mrb[0].mxu0 %v725
        %v764 = vpop.f32.mrb[0].mxu0
        %v765 = vadd.f32 0.0, %v764
        %v766 = vpop.f32.mrb[0].mxu0
        %v767 = vpop.f32.mrb[0].mxu0
        %v768 = vadd.f32 0.0, %v767
        %v769 = vpop.f32.mrb[0].mxu0
        %770 = vdwg.mxu0
        %v771 = vmul.f32 %v765, 0.17677669
        %v772 = vmul.f32 %v768, 0.17677669
        %vm773 = vcmask 130048
        %v774 = vsel %vm773, %v771, -inf
        %775 = vmax.xlane.f32.xlu0 %v774
        %v776 = vpop.xlane.xlu0 %775
        %v777 = vsel %vm773, %v772, -inf
        %778 = vmax.xlane.f32.xlu0 %v777
        %v779 = vpop.xlane.xlu0 %778
        %v780 = vsub.f32 %v771, %v776
        %v781 = vsub.f32 %v772, %v779
        %v782 = vmul.f32 %v780, 1.442695
        %v783 = vpow.pop %v782
        %v784 = vmul.f32 %v781, 1.442695
        %v785 = vpow.pop %v784
        %v786 = vsel %vm773, %v783, 0.0
        %787 = vadd.xlane.f32.xlu0 %v786
        %v788 = vpop.xlane.xlu0 %787
        %v789 = vsel %vm773, %v785, 0.0
        %790 = vadd.xlane.f32.xlu0 %v789
        %v791 = vpop.xlane.xlu0 %790
        %v792 = vrcp.pop %v788
        %v793 = vrcp.pop %v791
        %v794 = vmul.f32 %v783, %v792
        %v795 = vmul.f32 %v785, %v793
        %v796 = vpack.c.bf16 %v795, %v794
        %v798 = vsel %vm773, %v796, 0
        %800 = vmatprep.subr.bf16.mxu0 0
        %801 = vmatpush1.bf16.msra.mxu0 %v706
        %802 = vmatprep.subr.bf16.mxu0 0
        %803 = vmatpush1.bf16.msra.mxu0 0
        %804 = vmatprep.subr.bf16.mxu0 0
        %805 = vmatpush1.bf16.msra.mxu0 0
        %806 = vmatprep.subr.bf16.mxu0 0
        %807 = vmatpush1.bf16.msra.mxu0 0
        %808 = vmatprep.subr.bf16.mxu0 0
        %809 = vmatpush1.bf16.msra.mxu0 0
        %810 = vmatprep.subr.bf16.mxu0 0
        %811 = vmatpush1.bf16.msra.mxu0 0
        %812 = vmatprep.subr.bf16.mxu0 0
        %813 = vmatpush1.bf16.msra.mxu0 0
        %814 = vmatprep.subr.bf16.mxu0 0
        %815 = vmatpush1.bf16.msra.mxu0 0
        %816 = vmatprep.subr.bf16.mxu0 0
        %817 = vmatpush1.bf16.msra.mxu0 0
        %818 = vmatprep.subr.bf16.mxu0 0
        %819 = vmatpush1.bf16.msra.mxu0 0
        %820 = vmatprep.subr.bf16.mxu0 0
        %821 = vmatpush1.bf16.msra.mxu0 0
        %822 = vmatprep.subr.bf16.mxu0 0
        %823 = vmatpush1.bf16.msra.mxu0 0
        %824 = vmatprep.subr.bf16.mxu0 0
        %825 = vmatpush1.bf16.msra.mxu0 0
        %826 = vmatprep.subr.bf16.mxu0 0
        %827 = vmatpush1.bf16.msra.mxu0 0
        %828 = vmatprep.subr.bf16.mxu0 0
        %829 = vmatpush1.bf16.msra.mxu0 0
        %830 = vmatprep.subr.bf16.mxu0 0
        %831 = vmatpush1.bf16.msra.mxu0 0
        %832 = vmatprep.mubr.bf16.mxu0 0
        %833 = vmatmul.mubr.bf16.gmra.mrb[0].mxu0 %v798
        %v834 = vpop.f32.mrb[0].mxu0
        %v835 = vadd.f32 0.0, %v834
        %v836 = vpop.f32.mrb[0].mxu0
        %v837 = vpop.f32.mrb[0].mxu0
        %v838 = vadd.f32 0.0, %v837
        %v839 = vpop.f32.mrb[0].mxu0
        %840 = vdwg.mxu0
        %v841 = vpack.c.bf16 %v838, %v835
        %843 = vrot.lane.b32.xlu0 %v704, 96
        %v844 = vpop.permute.xlu0 %843
        %846 = vrot.lane.b32.xlu0 %v705, 96
        %v847 = vpop.permute.xlu0 %846
        %v849 = vsel %vm723, %v844, 0
        %v852 = vsel %vm723, %v847, 0
        %854 = vmatprep.subr.bf16.mxu0 0
        %855 = vmatpush1.bf16.xpose.msra.mxu0 %v852
        %856 = vmatprep.subr.bf16.mxu0 0
        %857 = vmatpush1.bf16.xpose.msra.mxu0 0
        %858 = vmatprep.subr.bf16.mxu0 0
        %859 = vmatpush1.bf16.xpose.msra.mxu0 0
        %860 = vmatprep.subr.bf16.mxu0 0
        %861 = vmatpush1.bf16.xpose.msra.mxu0 0
        %862 = vmatprep.subr.bf16.mxu0 0
        %863 = vmatpush1.bf16.xpose.msra.mxu0 0
        %864 = vmatprep.subr.bf16.mxu0 0
        %865 = vmatpush1.bf16.xpose.msra.mxu0 0
        %866 = vmatprep.subr.bf16.mxu0 0
        %867 = vmatpush1.bf16.xpose.msra.mxu0 0
        %868 = vmatprep.subr.bf16.mxu0 0
        %869 = vmatpush1.bf16.xpose.msra.mxu0 0
        %870 = vmatprep.subr.bf16.mxu0 0
        %871 = vmatpush1.bf16.xpose.msra.mxu0 0
        %872 = vmatprep.subr.bf16.mxu0 0
        %873 = vmatpush1.bf16.xpose.msra.mxu0 0
        %874 = vmatprep.subr.bf16.mxu0 0
        %875 = vmatpush1.bf16.xpose.msra.mxu0 0
        %876 = vmatprep.subr.bf16.mxu0 0
        %877 = vmatpush1.bf16.xpose.msra.mxu0 0
        %878 = vmatprep.subr.bf16.mxu0 0
        %879 = vmatpush1.bf16.xpose.msra.mxu0 0
        %880 = vmatprep.subr.bf16.mxu0 0
        %881 = vmatpush1.bf16.xpose.msra.mxu0 0
        %882 = vmatprep.subr.bf16.mxu0 0
        %883 = vmatpush1.bf16.xpose.msra.mxu0 0
        %884 = vmatprep.subr.bf16.mxu0 0
        %885 = vmatpush1.bf16.xpose.msra.mxu0 0
        %886 = vmatprep.mubr.bf16.mxu0 0
        %887 = vmatmul.mubr.bf16.gmra.mrb[0].mxu0 %v849
        %v888 = vpop.f32.mrb[0].mxu0
        %v889 = vadd.f32 0.0, %v888
        %v890 = vpop.f32.mrb[0].mxu0
        %v891 = vpop.f32.mrb[0].mxu0
        %v892 = vadd.f32 0.0, %v891
        %v893 = vpop.f32.mrb[0].mxu0
        %894 = vdwg.mxu0
        %v895 = vmul.f32 %v889, 0.17677669
        %v896 = vmul.f32 %v892, 0.17677669
        %v897 = vsel %vm773, %v895, -inf
        %898 = vmax.xlane.f32.xlu0 %v897
        %v899 = vpop.xlane.xlu0 %898
        %v900 = vsel %vm773, %v896, -inf
        %901 = vmax.xlane.f32.xlu0 %v900
        %v902 = vpop.xlane.xlu0 %901
        %v903 = vsub.f32 %v895, %v899
        %v904 = vsub.f32 %v896, %v902
        %v905 = vmul.f32 %v903, 1.442695
        %v906 = vpow.pop %v905
        %v907 = vmul.f32 %v904, 1.442695
        %v908 = vpow.pop %v907
        %v909 = vsel %vm773, %v906, 0.0
        %910 = vadd.xlane.f32.xlu0 %v909
        %v911 = vpop.xlane.xlu0 %910
        %v912 = vsel %vm773, %v908, 0.0
        %913 = vadd.xlane.f32.xlu0 %v912
        %v914 = vpop.xlane.xlu0 %913
        %v915 = vrcp.pop %v911
        %v916 = vrcp.pop %v914
        %v917 = vmul.f32 %v906, %v915
        %v918 = vmul.f32 %v908, %v916
        %v919 = vpack.c.bf16 %v918, %v917
        %921 = vrot.lane.b32.xlu0 %v706, 96
        %v922 = vpop.permute.xlu0 %921
        %v925 = vsel %vm773, %v919, 0
        %927 = vmatprep.subr.bf16.mxu0 0
        %928 = vmatpush1.bf16.msra.mxu0 %v922
        %929 = vmatprep.subr.bf16.mxu0 0
        %930 = vmatpush1.bf16.msra.mxu0 0
        %931 = vmatprep.subr.bf16.mxu0 0
        %932 = vmatpush1.bf16.msra.mxu0 0
        %933 = vmatprep.subr.bf16.mxu0 0
        %934 = vmatpush1.bf16.msra.mxu0 0
        %935 = vmatprep.subr.bf16.mxu0 0
        %936 = vmatpush1.bf16.msra.mxu0 0
        %937 = vmatprep.subr.bf16.mxu0 0
        %938 = vmatpush1.bf16.msra.mxu0 0
        %939 = vmatprep.subr.bf16.mxu0 0
        %940 = vmatpush1.bf16.msra.mxu0 0
        %941 = vmatprep.subr.bf16.mxu0 0
        %942 = vmatpush1.bf16.msra.mxu0 0
        %943 = vmatprep.subr.bf16.mxu0 0
        %944 = vmatpush1.bf16.msra.mxu0 0
        %945 = vmatprep.subr.bf16.mxu0 0
        %946 = vmatpush1.bf16.msra.mxu0 0
        %947 = vmatprep.subr.bf16.mxu0 0
        %948 = vmatpush1.bf16.msra.mxu0 0
        %949 = vmatprep.subr.bf16.mxu0 0
        %950 = vmatpush1.bf16.msra.mxu0 0
        %951 = vmatprep.subr.bf16.mxu0 0
        %952 = vmatpush1.bf16.msra.mxu0 0
        %953 = vmatprep.subr.bf16.mxu0 0
        %954 = vmatpush1.bf16.msra.mxu0 0
        %955 = vmatprep.subr.bf16.mxu0 0
        %956 = vmatpush1.bf16.msra.mxu0 0
        %957 = vmatprep.subr.bf16.mxu0 0
        %958 = vmatpush1.bf16.msra.mxu0 0
        %959 = vmatprep.mubr.bf16.mxu0 0
        %960 = vmatmul.mubr.bf16.gmra.mrb[0].mxu0 %v925
        %v961 = vpop.f32.mrb[0].mxu0
        %v962 = vadd.f32 0.0, %v961
        %v963 = vpop.f32.mrb[0].mxu0
        %v964 = vpop.f32.mrb[0].mxu0
        %v965 = vadd.f32 0.0, %v964
        %v966 = vpop.f32.mrb[0].mxu0
        %967 = vdwg.mxu0
        %v968 = vpack.c.bf16 %v965, %v962
        %v973 = vunpack.c.l.b16 %v711
        %v974 = vunpack.c.l.b16 %v712
        %v975 = vunpack.c.l.b16 %v713
        %v976 = vunpack.c.l.b16 %v714
        %v977 = vpack.c.b16 %v974, %v973
        %v978 = vpack.c.b16 %v976, %v975
        %v982 = vsel %vm723, %v968, 0
        %984 = vmatprep.subr.bf16.mxu0 0
        %985 = vmatpush1.bf16.msra.mxu0 %v977
        %986 = vmatprep.subr.bf16.mxu0 0
        %987 = vmatpush1.bf16.msra.mxu0 %v978
        %988 = vmatprep.subr.bf16.mxu0 0
        %989 = vmatpush1.bf16.msra.mxu0 0
        %990 = vmatprep.subr.bf16.mxu0 0
        %991 = vmatpush1.bf16.msra.mxu0 0
        %992 = vmatprep.subr.bf16.mxu0 0
        %993 = vmatpush1.bf16.msra.mxu0 0
        %994 = vmatprep.subr.bf16.mxu0 0
        %995 = vmatpush1.bf16.msra.mxu0 0
        %996 = vmatprep.subr.bf16.mxu0 0
        %997 = vmatpush1.bf16.msra.mxu0 0
        %998 = vmatprep.subr.bf16.mxu0 0
        %999 = vmatpush1.bf16.msra.mxu0 0
        %1000 = vmatprep.subr.bf16.mxu0 0
        %1001 = vmatpush1.bf16.msra.mxu0 0
        %1002 = vmatprep.subr.bf16.mxu0 0
        %1003 = vmatpush1.bf16.msra.mxu0 0
        %1004 = vmatprep.subr.bf16.mxu0 0
        %1005 = vmatpush1.bf16.msra.mxu0 0
        %1006 = vmatprep.subr.bf16.mxu0 0
        %1007 = vmatpush1.bf16.msra.mxu0 0
        %1008 = vmatprep.subr.bf16.mxu0 0
        %1009 = vmatpush1.bf16.msra.mxu0 0
        %1010 = vmatprep.subr.bf16.mxu0 0
        %1011 = vmatpush1.bf16.msra.mxu0 0
        %1012 = vmatprep.subr.bf16.mxu0 0
        %1013 = vmatpush1.bf16.msra.mxu0 0
        %1014 = vmatprep.subr.bf16.mxu0 0
        %1015 = vmatpush1.bf16.msra.mxu0 0
        %1016 = vmatprep.mubr.bf16.mxu0 0
        %1017 = vmatmul.mubr.bf16.gmra.mrb[0].mxu0 %v982
        %v1018 = vpop.f32.mrb[0].mxu0
        %v1019 = vadd.f32 0.0, %v1018
        %v1020 = vpop.f32.mrb[0].mxu0
        %v1021 = vpop.f32.mrb[0].mxu0
        %v1022 = vadd.f32 0.0, %v1021
        %v1023 = vpop.f32.mrb[0].mxu0
        %1024 = vdwg.mxu0
        %v1029 = vunpack.c.l.b16 %v707
        %v1030 = vunpack.c.l.b16 %v708
        %v1031 = vunpack.c.l.b16 %v709
        %v1032 = vunpack.c.l.b16 %v710
        %v1033 = vpack.c.b16 %v1030, %v1029
        %v1034 = vpack.c.b16 %v1032, %v1031
        %v1038 = vsel %vm723, %v841, 0
        %1040 = vmatprep.subr.bf16.mxu0 0
        %1041 = vmatpush1.bf16.msra.mxu0 %v1033
        %1042 = vmatprep.subr.bf16.mxu0 0
        %1043 = vmatpush1.bf16.msra.mxu0 %v1034
        %1044 = vmatprep.subr.bf16.mxu0 0
        %1045 = vmatpush1.bf16.msra.mxu0 0
        %1046 = vmatprep.subr.bf16.mxu0 0
        %1047 = vmatpush1.bf16.msra.mxu0 0
        %1048 = vmatprep.subr.bf16.mxu0 0
        %1049 = vmatpush1.bf16.msra.mxu0 0
        %1050 = vmatprep.subr.bf16.mxu0 0
        %1051 = vmatpush1.bf16.msra.mxu0 0
        %1052 = vmatprep.subr.bf16.mxu0 0
        %1053 = vmatpush1.bf16.msra.mxu0 0
        %1054 = vmatprep.subr.bf16.mxu0 0
        %1055 = vmatpush1.bf16.msra.mxu0 0
        %1056 = vmatprep.subr.bf16.mxu0 0
        %1057 = vmatpush1.bf16.msra.mxu0 0
        %1058 = vmatprep.subr.bf16.mxu0 0
        %1059 = vmatpush1.bf16.msra.mxu0 0
        %1060 = vmatprep.subr.bf16.mxu0 0
        %1061 = vmatpush1.bf16.msra.mxu0 0
        %1062 = vmatprep.subr.bf16.mxu0 0
        %1063 = vmatpush1.bf16.msra.mxu0 0
        %1064 = vmatprep.subr.bf16.mxu0 0
        %1065 = vmatpush1.bf16.msra.mxu0 0
        %1066 = vmatprep.subr.bf16.mxu0 0
        %1067 = vmatpush1.bf16.msra.mxu0 0
        %1068 = vmatprep.subr.bf16.mxu0 0
        %1069 = vmatpush1.bf16.msra.mxu0 0
        %1070 = vmatprep.subr.bf16.mxu0 0
        %1071 = vmatpush1.bf16.msra.mxu0 0
        %1072 = vmatprep.mubr.bf16.mxu0 0
        %1073 = vmatmul.mubr.bf16.gmra.mrb[0].mxu0 %v1038
        %v1074 = vpop.f32.mrb[0].mxu0
        %v1075 = vadd.f32 %v1019, %v1074
        %v1076 = vpop.f32.mrb[0].mxu0
        %v1077 = vpop.f32.mrb[0].mxu0
        %v1078 = vadd.f32 %v1022, %v1077
        %v1079 = vpop.f32.mrb[0].mxu0
        %1080 = vdwg.mxu0
        %1081 = vrot.lane.b32.xlu0 %v704, 64
        %v1082 = vpop.permute.xlu0 %1081
        %1083 = vrot.lane.b32.xlu0 %v705, 64
        %v1084 = vpop.permute.xlu0 %1083
        %v1086 = vsel %vm723, %v1082, 0
        %v1089 = vsel %vm723, %v1084, 0
        %1091 = vmatprep.subr.bf16.mxu0 0
        %1092 = vmatpush1.bf16.xpose.msra.mxu0 %v1089
        %1093 = vmatprep.subr.bf16.mxu0 0
        %1094 = vmatpush1.bf16.xpose.msra.mxu0 0
        %1095 = vmatprep.subr.bf16.mxu0 0
        %1096 = vmatpush1.bf16.xpose.msra.mxu0 0
        %1097 = vmatprep.subr.bf16.mxu0 0
        %1098 = vmatpush1.bf16.xpose.msra.mxu0 0
        %1099 = vmatprep.subr.bf16.mxu0 0
        %1100 = vmatpush1.bf16.xpose.msra.mxu0 0
        %1101 = vmatprep.subr.bf16.mxu0 0
        %1102 = vmatpush1.bf16.xpose.msra.mxu0 0
        %1103 = vmatprep.subr.bf16.mxu0 0
        %1104 = vmatpush1.bf16.xpose.msra.mxu0 0
        %1105 = vmatprep.subr.bf16.mxu0 0
        %1106 = vmatpush1.bf16.xpose.msra.mxu0 0
        %1107 = vmatprep.subr.bf16.mxu0 0
        %1108 = vmatpush1.bf16.xpose.msra.mxu0 0
        %1109 = vmatprep.subr.bf16.mxu0 0
        %1110 = vmatpush1.bf16.xpose.msra.mxu0 0
        %1111 = vmatprep.subr.bf16.mxu0 0
        %1112 = vmatpush1.bf16.xpose.msra.mxu0 0
        %1113 = vmatprep.subr.bf16.mxu0 0
        %1114 = vmatpush1.bf16.xpose.msra.mxu0 0
        %1115 = vmatprep.subr.bf16.mxu0 0
        %1116 = vmatpush1.bf16.xpose.msra.mxu0 0
        %1117 = vmatprep.subr.bf16.mxu0 0
        %1118 = vmatpush1.bf16.xpose.msra.mxu0 0
        %1119 = vmatprep.subr.bf16.mxu0 0
        %1120 = vmatpush1.bf16.xpose.msra.mxu0 0
        %1121 = vmatprep.subr.bf16.mxu0 0
        %1122 = vmatpush1.bf16.xpose.msra.mxu0 0
        %1123 = vmatprep.mubr.bf16.mxu0 0
        %1124 = vmatmul.mubr.bf16.gmra.mrb[0].mxu0 %v1086
        %v1125 = vpop.f32.mrb[0].mxu0
        %v1126 = vadd.f32 0.0, %v1125
        %v1127 = vpop.f32.mrb[0].mxu0
        %v1128 = vpop.f32.mrb[0].mxu0
        %v1129 = vadd.f32 0.0, %v1128
        %v1130 = vpop.f32.mrb[0].mxu0
        %1131 = vdwg.mxu0
        %v1132 = vmul.f32 %v1126, 0.17677669
        %v1133 = vmul.f32 %v1129, 0.17677669
        %v1134 = vsel %vm773, %v1132, -inf
        %1135 = vmax.xlane.f32.xlu0 %v1134
        %v1136 = vpop.xlane.xlu0 %1135
        %v1137 = vsel %vm773, %v1133, -inf
        %1138 = vmax.xlane.f32.xlu0 %v1137
        %v1139 = vpop.xlane.xlu0 %1138
        %v1140 = vsub.f32 %v1132, %v1136
        %v1141 = vsub.f32 %v1133, %v1139
        %v1142 = vmul.f32 %v1140, 1.442695
        %v1143 = vpow.pop %v1142
        %v1144 = vmul.f32 %v1141, 1.442695
        %v1145 = vpow.pop %v1144
        %v1146 = vsel %vm773, %v1143, 0.0
        %1147 = vadd.xlane.f32.xlu0 %v1146
        %v1148 = vpop.xlane.xlu0 %1147
        %v1149 = vsel %vm773, %v1145, 0.0
        %1150 = vadd.xlane.f32.xlu0 %v1149
        %v1151 = vpop.xlane.xlu0 %1150
        %v1152 = vrcp.pop %v1148
        %v1153 = vrcp.pop %v1151
        %v1154 = vmul.f32 %v1143, %v1152
        %v1155 = vmul.f32 %v1145, %v1153
        %v1156 = vpack.c.bf16 %v1155, %v1154
        %1157 = vrot.lane.b32.xlu0 %v706, 64
        %v1158 = vpop.permute.xlu0 %1157
        %v1161 = vsel %vm773, %v1156, 0
        %1163 = vmatprep.subr.bf16.mxu0 0
        %1164 = vmatpush1.bf16.msra.mxu0 %v1158
        %1165 = vmatprep.subr.bf16.mxu0 0
        %1166 = vmatpush1.bf16.msra.mxu0 0
        %1167 = vmatprep.subr.bf16.mxu0 0
        %1168 = vmatpush1.bf16.msra.mxu0 0
        %1169 = vmatprep.subr.bf16.mxu0 0
        %1170 = vmatpush1.bf16.msra.mxu0 0
        %1171 = vmatprep.subr.bf16.mxu0 0
        %1172 = vmatpush1.bf16.msra.mxu0 0
        %1173 = vmatprep.subr.bf16.mxu0 0
        %1174 = vmatpush1.bf16.msra.mxu0 0
        %1175 = vmatprep.subr.bf16.mxu0 0
        %1176 = vmatpush1.bf16.msra.mxu0 0
        %1177 = vmatprep.subr.bf16.mxu0 0
        %1178 = vmatpush1.bf16.msra.mxu0 0
        %1179 = vmatprep.subr.bf16.mxu0 0
        %1180 = vmatpush1.bf16.msra.mxu0 0
        %1181 = vmatprep.subr.bf16.mxu0 0
        %1182 = vmatpush1.bf16.msra.mxu0 0
        %1183 = vmatprep.subr.bf16.mxu0 0
        %1184 = vmatpush1.bf16.msra.mxu0 0
        %1185 = vmatprep.subr.bf16.mxu0 0
        %1186 = vmatpush1.bf16.msra.mxu0 0
        %1187 = vmatprep.subr.bf16.mxu0 0
        %1188 = vmatpush1.bf16.msra.mxu0 0
        %1189 = vmatprep.subr.bf16.mxu0 0
        %1190 = vmatpush1.bf16.msra.mxu0 0
        %1191 = vmatprep.subr.bf16.mxu0 0
        %1192 = vmatpush1.bf16.msra.mxu0 0
        %1193 = vmatprep.subr.bf16.mxu0 0
        %1194 = vmatpush1.bf16.msra.mxu0 0
        %1195 = vmatprep.mubr.bf16.mxu0 0
        %1196 = vmatmul.mubr.bf16.gmra.mrb[0].mxu0 %v1161
        %v1197 = vpop.f32.mrb[0].mxu0
        %v1198 = vadd.f32 0.0, %v1197
        %v1199 = vpop.f32.mrb[0].mxu0
        %v1200 = vpop.f32.mrb[0].mxu0
        %v1201 = vadd.f32 0.0, %v1200
        %v1202 = vpop.f32.mrb[0].mxu0
        %1203 = vdwg.mxu0
        %v1204 = vpack.c.bf16 %v1201, %v1198
        %v1209 = vunpack.c.l.b16 %v715
        %v1210 = vunpack.c.l.b16 %v716
        %v1211 = vunpack.c.l.b16 %v717
        %v1212 = vunpack.c.l.b16 %v718
        %v1213 = vpack.c.b16 %v1210, %v1209
        %v1214 = vpack.c.b16 %v1212, %v1211
        %v1218 = vsel %vm723, %v1204, 0
        %1220 = vmatprep.subr.bf16.mxu0 0
        %1221 = vmatpush1.bf16.msra.mxu0 %v1213
        %1222 = vmatprep.subr.bf16.mxu0 0
        %1223 = vmatpush1.bf16.msra.mxu0 %v1214
        %1224 = vmatprep.subr.bf16.mxu0 0
        %1225 = vmatpush1.bf16.msra.mxu0 0
        %1226 = vmatprep.subr.bf16.mxu0 0
        %1227 = vmatpush1.bf16.msra.mxu0 0
        %1228 = vmatprep.subr.bf16.mxu0 0
        %1229 = vmatpush1.bf16.msra.mxu0 0
        %1230 = vmatprep.subr.bf16.mxu0 0
        %1231 = vmatpush1.bf16.msra.mxu0 0
        %1232 = vmatprep.subr.bf16.mxu0 0
        %1233 = vmatpush1.bf16.msra.mxu0 0
        %1234 = vmatprep.subr.bf16.mxu0 0
        %1235 = vmatpush1.bf16.msra.mxu0 0
        %1236 = vmatprep.subr.bf16.mxu0 0
        %1237 = vmatpush1.bf16.msra.mxu0 0
        %1238 = vmatprep.subr.bf16.mxu0 0
        %1239 = vmatpush1.bf16.msra.mxu0 0
        %1240 = vmatprep.subr.bf16.mxu0 0
        %1241 = vmatpush1.bf16.msra.mxu0 0
        %1242 = vmatprep.subr.bf16.mxu0 0
        %1243 = vmatpush1.bf16.msra.mxu0 0
        %1244 = vmatprep.subr.bf16.mxu0 0
        %1245 = vmatpush1.bf16.msra.mxu0 0
        %1246 = vmatprep.subr.bf16.mxu0 0
        %1247 = vmatpush1.bf16.msra.mxu0 0
        %1248 = vmatprep.subr.bf16.mxu0 0
        %1249 = vmatpush1.bf16.msra.mxu0 0
        %1250 = vmatprep.subr.bf16.mxu0 0
        %1251 = vmatpush1.bf16.msra.mxu0 0
        %1252 = vmatprep.mubr.bf16.mxu0 0
        %1253 = vmatmul.mubr.bf16.gmra.mrb[0].mxu0 %v1218
        %v1254 = vpop.f32.mrb[0].mxu0
        %v1255 = vadd.f32 0.0, %v1254
        %v1256 = vpop.f32.mrb[0].mxu0
        %v1257 = vpop.f32.mrb[0].mxu0
        %v1258 = vadd.f32 0.0, %v1257
        %v1259 = vpop.f32.mrb[0].mxu0
        %1260 = vdwg.mxu0
        %v1261 = vadd.f32 %v1075, %v1255
        %v1262 = vadd.f32 %v1078, %v1258
        %1263 = vrot.lane.b32.xlu0 %v704, 32
        %v1264 = vpop.permute.xlu0 %1263
        %1265 = vrot.lane.b32.xlu0 %v705, 32
        %v1266 = vpop.permute.xlu0 %1265
        %v1268 = vsel %vm723, %v1264, 0
        %v1271 = vsel %vm723, %v1266, 0
        %1273 = vmatprep.subr.bf16.mxu0 0
        %1274 = vmatpush1.bf16.xpose.msra.mxu0 %v1271
        %1275 = vmatprep.subr.bf16.mxu0 0
        %1276 = vmatpush1.bf16.xpose.msra.mxu0 0
        %1277 = vmatprep.subr.bf16.mxu0 0
        %1278 = vmatpush1.bf16.xpose.msra.mxu0 0
        %1279 = vmatprep.subr.bf16.mxu0 0
        %1280 = vmatpush1.bf16.xpose.msra.mxu0 0
        %1281 = vmatprep.subr.bf16.mxu0 0
        %1282 = vmatpush1.bf16.xpose.msra.mxu0 0
        %1283 = vmatprep.subr.bf16.mxu0 0
        %1284 = vmatpush1.bf16.xpose.msra.mxu0 0
        %1285 = vmatprep.subr.bf16.mxu0 0
        %1286 = vmatpush1.bf16.xpose.msra.mxu0 0
        %1287 = vmatprep.subr.bf16.mxu0 0
        %1288 = vmatpush1.bf16.xpose.msra.mxu0 0
        %1289 = vmatprep.subr.bf16.mxu0 0
        %1290 = vmatpush1.bf16.xpose.msra.mxu0 0
        %1291 = vmatprep.subr.bf16.mxu0 0
        %1292 = vmatpush1.bf16.xpose.msra.mxu0 0
        %1293 = vmatprep.subr.bf16.mxu0 0
        %1294 = vmatpush1.bf16.xpose.msra.mxu0 0
        %1295 = vmatprep.subr.bf16.mxu0 0
        %1296 = vmatpush1.bf16.xpose.msra.mxu0 0
        %1297 = vmatprep.subr.bf16.mxu0 0
        %1298 = vmatpush1.bf16.xpose.msra.mxu0 0
        %1299 = vmatprep.subr.bf16.mxu0 0
        %1300 = vmatpush1.bf16.xpose.msra.mxu0 0
        %1301 = vmatprep.subr.bf16.mxu0 0
        %1302 = vmatpush1.bf16.xpose.msra.mxu0 0
        %1303 = vmatprep.subr.bf16.mxu0 0
        %1304 = vmatpush1.bf16.xpose.msra.mxu0 0
        %1305 = vmatprep.mubr.bf16.mxu0 0
        %1306 = vmatmul.mubr.bf16.gmra.mrb[0].mxu0 %v1268
        %v1307 = vpop.f32.mrb[0].mxu0
        %v1308 = vadd.f32 0.0, %v1307
        %v1309 = vpop.f32.mrb[0].mxu0
        %v1310 = vpop.f32.mrb[0].mxu0
        %v1311 = vadd.f32 0.0, %v1310
        %v1312 = vpop.f32.mrb[0].mxu0
        %1313 = vdwg.mxu0
        %v1314 = vmul.f32 %v1308, 0.17677669
        %v1315 = vmul.f32 %v1311, 0.17677669
        %v1316 = vsel %vm773, %v1314, -inf
        %1317 = vmax.xlane.f32.xlu0 %v1316
        %v1318 = vpop.xlane.xlu0 %1317
        %v1319 = vsel %vm773, %v1315, -inf
        %1320 = vmax.xlane.f32.xlu0 %v1319
        %v1321 = vpop.xlane.xlu0 %1320
        %v1322 = vsub.f32 %v1314, %v1318
        %v1323 = vsub.f32 %v1315, %v1321
        %v1324 = vmul.f32 %v1322, 1.442695
        %v1325 = vpow.pop %v1324
        %v1326 = vmul.f32 %v1323, 1.442695
        %v1327 = vpow.pop %v1326
        %v1328 = vsel %vm773, %v1325, 0.0
        %1329 = vadd.xlane.f32.xlu0 %v1328
        %v1330 = vpop.xlane.xlu0 %1329
        %v1331 = vsel %vm773, %v1327, 0.0
        %1332 = vadd.xlane.f32.xlu0 %v1331
        %v1333 = vpop.xlane.xlu0 %1332
        %v1334 = vrcp.pop %v1330
        %v1335 = vrcp.pop %v1333
        %v1336 = vmul.f32 %v1325, %v1334
        %v1337 = vmul.f32 %v1327, %v1335
        %v1338 = vpack.c.bf16 %v1337, %v1336
        %1339 = vrot.lane.b32.xlu0 %v706, 32
        %v1340 = vpop.permute.xlu0 %1339
        %v1343 = vsel %vm773, %v1338, 0
        %1345 = vmatprep.subr.bf16.mxu0 0
        %1346 = vmatpush1.bf16.msra.mxu0 %v1340
        %1347 = vmatprep.subr.bf16.mxu0 0
        %1348 = vmatpush1.bf16.msra.mxu0 0
        %1349 = vmatprep.subr.bf16.mxu0 0
        %1350 = vmatpush1.bf16.msra.mxu0 0
        %1351 = vmatprep.subr.bf16.mxu0 0
        %1352 = vmatpush1.bf16.msra.mxu0 0
        %1353 = vmatprep.subr.bf16.mxu0 0
        %1354 = vmatpush1.bf16.msra.mxu0 0
        %1355 = vmatprep.subr.bf16.mxu0 0
        %1356 = vmatpush1.bf16.msra.mxu0 0
        %1357 = vmatprep.subr.bf16.mxu0 0
        %1358 = vmatpush1.bf16.msra.mxu0 0
        %1359 = vmatprep.subr.bf16.mxu0 0
        %1360 = vmatpush1.bf16.msra.mxu0 0
        %1361 = vmatprep.subr.bf16.mxu0 0
        %1362 = vmatpush1.bf16.msra.mxu0 0
        %1363 = vmatprep.subr.bf16.mxu0 0
        %1364 = vmatpush1.bf16.msra.mxu0 0
        %1365 = vmatprep.subr.bf16.mxu0 0
        %1366 = vmatpush1.bf16.msra.mxu0 0
        %1367 = vmatprep.subr.bf16.mxu0 0
        %1368 = vmatpush1.bf16.msra.mxu0 0
        %1369 = vmatprep.subr.bf16.mxu0 0
        %1370 = vmatpush1.bf16.msra.mxu0 0
        %1371 = vmatprep.subr.bf16.mxu0 0
        %1372 = vmatpush1.bf16.msra.mxu0 0
        %1373 = vmatprep.subr.bf16.mxu0 0
        %1374 = vmatpush1.bf16.msra.mxu0 0
        %1375 = vmatprep.subr.bf16.mxu0 0
        %1376 = vmatpush1.bf16.msra.mxu0 0
        %1377 = vmatprep.mubr.bf16.mxu0 0
        %1378 = vmatmul.mubr.bf16.gmra.mrb[0].mxu0 %v1343
        %v1379 = vpop.f32.mrb[0].mxu0
        %v1380 = vadd.f32 0.0, %v1379
        %v1381 = vpop.f32.mrb[0].mxu0
        %v1382 = vpop.f32.mrb[0].mxu0
        %v1383 = vadd.f32 0.0, %v1382
        %v1384 = vpop.f32.mrb[0].mxu0
        %1385 = vdwg.mxu0
        %v1386 = vpack.c.bf16 %v1383, %v1380
        %v1391 = vunpack.c.l.b16 %v719
        %v1392 = vunpack.c.l.b16 %v720
        %v1393 = vunpack.c.l.b16 %v721
        %v1394 = vunpack.c.l.b16 %v722
        %v1395 = vpack.c.b16 %v1392, %v1391
        %v1396 = vpack.c.b16 %v1394, %v1393
        %v1400 = vsel %vm723, %v1386, 0
        %1402 = vmatprep.subr.bf16.mxu0 0
        %1403 = vmatpush1.bf16.msra.mxu0 %v1395
        %1404 = vmatprep.subr.bf16.mxu0 0
        %1405 = vmatpush1.bf16.msra.mxu0 %v1396
        %1406 = vmatprep.subr.bf16.mxu0 0
        %1407 = vmatpush1.bf16.msra.mxu0 0
        %1408 = vmatprep.subr.bf16.mxu0 0
        %1409 = vmatpush1.bf16.msra.mxu0 0
        %1410 = vmatprep.subr.bf16.mxu0 0
        %1411 = vmatpush1.bf16.msra.mxu0 0
        %1412 = vmatprep.subr.bf16.mxu0 0
        %1413 = vmatpush1.bf16.msra.mxu0 0
        %1414 = vmatprep.subr.bf16.mxu0 0
        %1415 = vmatpush1.bf16.msra.mxu0 0
        %1416 = vmatprep.subr.bf16.mxu0 0
        %1417 = vmatpush1.bf16.msra.mxu0 0
        %1418 = vmatprep.subr.bf16.mxu0 0
        %1419 = vmatpush1.bf16.msra.mxu0 0
        %1420 = vmatprep.subr.bf16.mxu0 0
        %1421 = vmatpush1.bf16.msra.mxu0 0
        %1422 = vmatprep.subr.bf16.mxu0 0
        %1423 = vmatpush1.bf16.msra.mxu0 0
        %1424 = vmatprep.subr.bf16.mxu0 0
        %1425 = vmatpush1.bf16.msra.mxu0 0
        %1426 = vmatprep.subr.bf16.mxu0 0
        %1427 = vmatpush1.bf16.msra.mxu0 0
        %1428 = vmatprep.subr.bf16.mxu0 0
        %1429 = vmatpush1.bf16.msra.mxu0 0
        %1430 = vmatprep.subr.bf16.mxu0 0
        %1431 = vmatpush1.bf16.msra.mxu0 0
        %1432 = vmatprep.subr.bf16.mxu0 0
        %1433 = vmatpush1.bf16.msra.mxu0 0
        %1434 = vmatprep.mubr.bf16.mxu0 0
        %1435 = vmatmul.mubr.bf16.gmra.mrb[0].mxu0 %v1400
        %v1436 = vpop.f32.mrb[0].mxu0
        %v1437 = vadd.f32 0.0, %v1436
        %v1438 = vpop.f32.mrb[0].mxu0
        %v1439 = vpop.f32.mrb[0].mxu0
        %v1440 = vadd.f32 0.0, %v1439
        %v1441 = vpop.f32.mrb[0].mxu0
        %1442 = vdwg.mxu0
        %v1443 = vadd.f32 %v1261, %v1437
        %v1444 = vadd.f32 %v1262, %v1440
        %v1445 = vadd.f32 %v440, %v1443
        %v1446 = vadd.f32 %v441, %v1444
        %v1447 = vld [vmem:[%s4] sm:$0x1]
        %v1449 = vlaneseq
        %v1450 = vshrl.u32 %v1449, 7
        %v1451 = vsub.s32 0, %v1450
        %v1452 = vrot.slane %v1447, %v1451
        %v1454 = vadd.f32 %v1445, %v1452
        %v1455 = vadd.f32 %v1446, %v1452
        %v1456 = vld [vmem:[%s5] sm:$0x1]
        %v1457 = vld [vmem:[%s6] sm:$0x1]
        %1458 = vadd.xlane.f32.xlu0 %v1454
        %v1459 = vpop.xlane.xlu0 %1458
        %1460 = vadd.xlane.f32.xlu0 %v1455
        %v1461 = vpop.xlane.xlu0 %1460
        %v1462 = vrcp.pop 128.0
        %v1463 = vmul.f32 %v1459, %v1462
        %v1464 = vmul.f32 %v1461, %v1462
        %v1465 = vsub.f32 %v1454, %v1463
        %v1466 = vsub.f32 %v1455, %v1464
        %v1467 = vmul.f32 %v1465, %v1465
        %v1468 = vmul.f32 %v1466, %v1466
        %1469 = vadd.xlane.f32.xlu0 %v1467
        %v1470 = vpop.xlane.xlu0 %1469
        %1471 = vadd.xlane.f32.xlu0 %v1468
        %v1472 = vpop.xlane.xlu0 %1471
        %v1473 = vmul.f32 %v1470, %v1462
        %v1474 = vmul.f32 %v1472, %v1462
        %v1475 = vadd.f32 %v1473, 1e-05
        %v1476 = vadd.f32 %v1474, 1e-05
        %v1477 = vrsqrt.pop %v1475
        %v1478 = vrsqrt.pop %v1476
        %v1479 = vmul.f32 %v1465, %v1477
        %v1480 = vmul.f32 %v1466, %v1478
        %v1482 = vlaneseq
        %v1483 = vshrl.u32 %v1482, 7
        %v1484 = vsub.s32 0, %v1483
        %v1485 = vrot.slane %v1456, %v1484
        %v1487 = vmul.f32 %v1479, %v1485
        %v1488 = vmul.f32 %v1480, %v1485
        %v1490 = vlaneseq
        %v1491 = vshrl.u32 %v1490, 7
        %v1492 = vsub.s32 0, %v1491
        %v1493 = vrot.slane %v1457, %v1492
        %v1495 = vadd.f32 %v1487, %v1493
        %v1496 = vadd.f32 %v1488, %v1493
        %v1497 = vpack.c.bf16 %v1496, %v1495
        %v1498 = vld [vmem:[%s7] sm:$0xf]
        %v1499 = vld [vmem:[%s7 + $0x4] sm:$0xf]
        %v1500 = vld [vmem:[%s7 + $0x8] sm:$0xf]
        %v1501 = vld [vmem:[%s7 + $0xc] sm:$0xf]
        %v1502 = vld [vmem:[%s7 + $0x10] sm:$0xf]
        %v1503 = vld [vmem:[%s7 + $0x14] sm:$0xf]
        %v1504 = vld [vmem:[%s7 + $0x18] sm:$0xf]
        %v1505 = vld [vmem:[%s7 + $0x1c] sm:$0xf]
        %v1506 = vld [vmem:[%s7 + $0x20] sm:$0xf]
        %v1507 = vld [vmem:[%s7 + $0x24] sm:$0xf]
        %v1508 = vld [vmem:[%s7 + $0x28] sm:$0xf]
        %v1509 = vld [vmem:[%s7 + $0x2c] sm:$0xf]
        %v1510 = vld [vmem:[%s7 + $0x30] sm:$0xf]
        %v1511 = vld [vmem:[%s7 + $0x34] sm:$0xf]
        %v1512 = vld [vmem:[%s7 + $0x38] sm:$0xf]
        %v1513 = vld [vmem:[%s7 + $0x3c] sm:$0xf]
        %v1514 = vld [vmem:[%s8] sm:$0x1]
        %v1516 = vlaneseq
        %v1517 = vshrl.u32 %v1516, 7
        %v1518 = vsub.s32 0, %v1517
        %v1519 = vrot.slane %v1514, %v1518
        %v1537 = vunpack.c.l.b16 %v1498
        %v1538 = vunpack.c.l.b16 %v1499
        %v1539 = vunpack.c.l.b16 %v1500
        %v1540 = vunpack.c.l.b16 %v1501
        %v1541 = vunpack.c.l.b16 %v1502
        %v1542 = vunpack.c.l.b16 %v1503
        %v1543 = vunpack.c.l.b16 %v1504
        %v1544 = vunpack.c.l.b16 %v1505
        %v1545 = vunpack.c.l.b16 %v1506
        %v1546 = vunpack.c.l.b16 %v1507
        %v1547 = vunpack.c.l.b16 %v1508
        %v1548 = vunpack.c.l.b16 %v1509
        %v1549 = vunpack.c.l.b16 %v1510
        %v1550 = vunpack.c.l.b16 %v1511
        %v1551 = vunpack.c.l.b16 %v1512
        %v1552 = vunpack.c.l.b16 %v1513
        %v1553 = vpack.c.b16 %v1538, %v1537
        %v1554 = vpack.c.b16 %v1540, %v1539
        %v1555 = vpack.c.b16 %v1542, %v1541
        %v1556 = vpack.c.b16 %v1544, %v1543
        %v1557 = vpack.c.b16 %v1546, %v1545
        %v1558 = vpack.c.b16 %v1548, %v1547
        %v1559 = vpack.c.b16 %v1550, %v1549
        %v1560 = vpack.c.b16 %v1552, %v1551
        %1569 = vmatprep.subr.bf16.mxu0 0
        %1570 = vmatpush1.bf16.msra.mxu0 %v1553
        %1571 = vmatprep.subr.bf16.mxu0 0
        %1572 = vmatpush1.bf16.msra.mxu0 %v1554
        %1573 = vmatprep.subr.bf16.mxu0 0
        %1574 = vmatpush1.bf16.msra.mxu0 %v1555
        %1575 = vmatprep.subr.bf16.mxu0 0
        %1576 = vmatpush1.bf16.msra.mxu0 %v1556
        %1577 = vmatprep.subr.bf16.mxu0 0
        %1578 = vmatpush1.bf16.msra.mxu0 %v1557
        %1579 = vmatprep.subr.bf16.mxu0 0
        %1580 = vmatpush1.bf16.msra.mxu0 %v1558
        %1581 = vmatprep.subr.bf16.mxu0 0
        %1582 = vmatpush1.bf16.msra.mxu0 %v1559
        %1583 = vmatprep.subr.bf16.mxu0 0
        %1584 = vmatpush1.bf16.msra.mxu0 %v1560
        %1585 = vmatprep.subr.bf16.mxu0 0
        %1586 = vmatpush1.bf16.msra.mxu0 0
        %1587 = vmatprep.subr.bf16.mxu0 0
        %1588 = vmatpush1.bf16.msra.mxu0 0
        %1589 = vmatprep.subr.bf16.mxu0 0
        %1590 = vmatpush1.bf16.msra.mxu0 0
        %1591 = vmatprep.subr.bf16.mxu0 0
        %1592 = vmatpush1.bf16.msra.mxu0 0
        %1593 = vmatprep.subr.bf16.mxu0 0
        %1594 = vmatpush1.bf16.msra.mxu0 0
        %1595 = vmatprep.subr.bf16.mxu0 0
        %1596 = vmatpush1.bf16.msra.mxu0 0
        %1597 = vmatprep.subr.bf16.mxu0 0
        %1598 = vmatpush1.bf16.msra.mxu0 0
        %1599 = vmatprep.subr.bf16.mxu0 0
        %1600 = vmatpush1.bf16.msra.mxu0 0
        %1601 = vmatprep.mubr.bf16.mxu0 0
        %1602 = vmatmul.mubr.bf16.gmra.mrb[0].mxu0 %v1497
        %v1603 = vpop.f32.mrb[0].mxu0
        %v1604 = vadd.f32 %v1519, %v1603
        %v1605 = vpop.f32.mrb[0].mxu0
        %v1606 = vpop.f32.mrb[0].mxu0
        %v1607 = vadd.f32 %v1519, %v1606
        %v1608 = vpop.f32.mrb[0].mxu0
        %1609 = vdwg.mxu0
        %v1610 = vmax.f32 %v1604, 0.0
        %v1611 = vmax.f32 %v1607, 0.0
        %v1612 = vpack.c.bf16 %v1611, %v1610
        %v1613 = vld [vmem:[%s9] sm:$0xf]
        %v1614 = vld [vmem:[%s9 + $0x4] sm:$0xf]
        %v1615 = vld [vmem:[%s9 + $0x8] sm:$0xf]
        %v1616 = vld [vmem:[%s9 + $0xc] sm:$0xf]
        %v1617 = vld [vmem:[%s9 + $0x10] sm:$0xf]
        %v1618 = vld [vmem:[%s9 + $0x14] sm:$0xf]
        %v1619 = vld [vmem:[%s9 + $0x18] sm:$0xf]
        %v1620 = vld [vmem:[%s9 + $0x1c] sm:$0xf]
        %v1621 = vld [vmem:[%s9 + $0x20] sm:$0xf]
        %v1622 = vld [vmem:[%s9 + $0x24] sm:$0xf]
        %v1623 = vld [vmem:[%s9 + $0x28] sm:$0xf]
        %v1624 = vld [vmem:[%s9 + $0x2c] sm:$0xf]
        %v1625 = vld [vmem:[%s9 + $0x30] sm:$0xf]
        %v1626 = vld [vmem:[%s9 + $0x34] sm:$0xf]
        %v1627 = vld [vmem:[%s9 + $0x38] sm:$0xf]
        %v1628 = vld [vmem:[%s9 + $0x3c] sm:$0xf]
        %v1629 = vld [vmem:[%s10] sm:$0x1]
        %v1631 = vlaneseq
        %v1632 = vshrl.u32 %v1631, 7
        %v1633 = vsub.s32 0, %v1632
        %v1634 = vrot.slane %v1629, %v1633
        %v1652 = vunpack.c.l.b16 %v1613
        %v1653 = vunpack.c.l.b16 %v1614
        %v1654 = vunpack.c.l.b16 %v1615
        %v1655 = vunpack.c.l.b16 %v1616
        %v1656 = vunpack.c.l.b16 %v1617
        %v1657 = vunpack.c.l.b16 %v1618
        %v1658 = vunpack.c.l.b16 %v1619
        %v1659 = vunpack.c.l.b16 %v1620
        %v1660 = vunpack.c.l.b16 %v1621
        %v1661 = vunpack.c.l.b16 %v1622
        %v1662 = vunpack.c.l.b16 %v1623
        %v1663 = vunpack.c.l.b16 %v1624
        %v1664 = vunpack.c.l.b16 %v1625
        %v1665 = vunpack.c.l.b16 %v1626
        %v1666 = vunpack.c.l.b16 %v1627
        %v1667 = vunpack.c.l.b16 %v1628
        %v1668 = vpack.c.b16 %v1653, %v1652
        %v1669 = vpack.c.b16 %v1655, %v1654
        %v1670 = vpack.c.b16 %v1657, %v1656
        %v1671 = vpack.c.b16 %v1659, %v1658
        %v1672 = vpack.c.b16 %v1661, %v1660
        %v1673 = vpack.c.b16 %v1663, %v1662
        %v1674 = vpack.c.b16 %v1665, %v1664
        %v1675 = vpack.c.b16 %v1667, %v1666
        %1684 = vmatprep.subr.bf16.mxu0 0
        %1685 = vmatpush1.bf16.msra.mxu0 %v1668
        %1686 = vmatprep.subr.bf16.mxu0 0
        %1687 = vmatpush1.bf16.msra.mxu0 %v1669
        %1688 = vmatprep.subr.bf16.mxu0 0
        %1689 = vmatpush1.bf16.msra.mxu0 %v1670
        %1690 = vmatprep.subr.bf16.mxu0 0
        %1691 = vmatpush1.bf16.msra.mxu0 %v1671
        %1692 = vmatprep.subr.bf16.mxu0 0
        %1693 = vmatpush1.bf16.msra.mxu0 %v1672
        %1694 = vmatprep.subr.bf16.mxu0 0
        %1695 = vmatpush1.bf16.msra.mxu0 %v1673
        %1696 = vmatprep.subr.bf16.mxu0 0
        %1697 = vmatpush1.bf16.msra.mxu0 %v1674
        %1698 = vmatprep.subr.bf16.mxu0 0
        %1699 = vmatpush1.bf16.msra.mxu0 %v1675
        %1700 = vmatprep.subr.bf16.mxu0 0
        %1701 = vmatpush1.bf16.msra.mxu0 0
        %1702 = vmatprep.subr.bf16.mxu0 0
        %1703 = vmatpush1.bf16.msra.mxu0 0
        %1704 = vmatprep.subr.bf16.mxu0 0
        %1705 = vmatpush1.bf16.msra.mxu0 0
        %1706 = vmatprep.subr.bf16.mxu0 0
        %1707 = vmatpush1.bf16.msra.mxu0 0
        %1708 = vmatprep.subr.bf16.mxu0 0
        %1709 = vmatpush1.bf16.msra.mxu0 0
        %1710 = vmatprep.subr.bf16.mxu0 0
        %1711 = vmatpush1.bf16.msra.mxu0 0
        %1712 = vmatprep.subr.bf16.mxu0 0
        %1713 = vmatpush1.bf16.msra.mxu0 0
        %1714 = vmatprep.subr.bf16.mxu0 0
        %1715 = vmatpush1.bf16.msra.mxu0 0
        %1716 = vmatprep.mubr.bf16.mxu0 0
        %1717 = vmatmul.mubr.bf16.gmra.mrb[0].mxu0 %v1612
        %v1718 = vpop.f32.mrb[0].mxu0
        %v1719 = vadd.f32 %v1634, %v1718
        %v1720 = vpop.f32.mrb[0].mxu0
        %v1721 = vpop.f32.mrb[0].mxu0
        %v1722 = vadd.f32 %v1634, %v1721
        %v1723 = vpop.f32.mrb[0].mxu0
        %1724 = vdwg.mxu0
        %v1725 = vadd.f32 %v1495, %v1719
        %v1726 = vadd.f32 %v1496, %v1722
        %v1727 = vld [vmem:[%s11] sm:$0x1]
        %v1728 = vld [vmem:[%s12] sm:$0x1]
        %1729 = vadd.xlane.f32.xlu0 %v1725
        %v1730 = vpop.xlane.xlu0 %1729
        %1731 = vadd.xlane.f32.xlu0 %v1726
        %v1732 = vpop.xlane.xlu0 %1731
        %v1733 = vmul.f32 %v1730, %v1462
        %v1734 = vmul.f32 %v1732, %v1462
        %v1735 = vsub.f32 %v1725, %v1733
        %v1736 = vsub.f32 %v1726, %v1734
        %v1737 = vmul.f32 %v1735, %v1735
        %v1738 = vmul.f32 %v1736, %v1736
        %1739 = vadd.xlane.f32.xlu0 %v1737
        %v1740 = vpop.xlane.xlu0 %1739
        %1741 = vadd.xlane.f32.xlu0 %v1738
        %v1742 = vpop.xlane.xlu0 %1741
        %v1743 = vmul.f32 %v1740, %v1462
        %v1744 = vmul.f32 %v1742, %v1462
        %v1745 = vadd.f32 %v1743, 1e-05
        %v1746 = vadd.f32 %v1744, 1e-05
        %v1747 = vrsqrt.pop %v1745
        %v1748 = vrsqrt.pop %v1746
        %v1749 = vmul.f32 %v1735, %v1747
        %v1750 = vmul.f32 %v1736, %v1748
        %v1752 = vlaneseq
        %v1753 = vshrl.u32 %v1752, 7
        %v1754 = vsub.s32 0, %v1753
        %v1755 = vrot.slane %v1727, %v1754
        %v1757 = vmul.f32 %v1749, %v1755
        %v1758 = vmul.f32 %v1750, %v1755
        %v1760 = vlaneseq
        %v1761 = vshrl.u32 %v1760, 7
        %v1762 = vsub.s32 0, %v1761
        %v1763 = vrot.slane %v1728, %v1762
        %v1765 = vadd.f32 %v1757, %v1763
        %v1766 = vadd.f32 %v1758, %v1763
        %1767 = vst [vmem:[%s433] sm:$0xff] %v1765
        %1768 = vst [vmem:[%s433 + $0x8] sm:$0xff] %v1766
        %s1769 = sand.u32 %s313, 1
        %s1770 = scalar_lea.sflag [#allocation3], %s1769
        %s1771 = sand.u32 %s313, 1
        %s1772 = smul.addr %s1771, 16
        %s1773 = scalar_lea.vmem [#allocation2], %s1772
        // Predicated region
        $region73: #{swin_block_forward.1} parent=71 // pred_check
          %p1774 = pneg %p323
        $region74: #{swin_block_forward.1} parent=71 // pred_check_branch
          %1776 = sbr.rel (%p1774) target = $region76
        $region75: #{swin_block_forward.1} parent=71 // pred_region
          %s1778 = ssub.s32 256, 256
          %1779 = vsyncadd %s1770, %s1778
          %s1780 = smul.addr %s27, 2
          %s1781 = smul.addr %s1780, 128
          %s1782 = scalar_lea.hbm %s13, %s1781
          %s1783 = sshll.u32 %s1773, 4
          %s1784 = int_to_ptr.vmem [resolvable:$true] %s1783
          %1789 = dma.vmem_to_hbm [thread:$0]  %s1784, 256, %s1782, %s1770, 128, 128, 8
        $region76: #{swin_block_forward.1} parent=71 // pred_fallthru
          _
      $region72: #{swin_block_forward.1} parent=5 // pred_fallthru
        _
      %p1790 = scmp.le.s32.totalorder 2, %s22
      // Predicated region
      $region77: #{swin_block_forward.1} parent=5 // pred_check
        %p1791 = pneg %p1790
      $region78: #{swin_block_forward.1} parent=5 // pred_check_branch
        %1793 = sbr.rel (%p1791) target = $region80
      $region79: #{swin_block_forward.1} parent=5 // pred_region
        %s1794 = ssub.s32 %s22, 2
        // Predicated region
        $region81: #{swin_block_forward.1} parent=79 // pred_check
          %p1795 = pneg %p329
        $region82: #{swin_block_forward.1} parent=79 // pred_check_branch
          %1797 = sbr.rel (%p1795) target = $region84
        $region83: #{swin_block_forward.1} parent=79 // pred_region
          %s1798 = sand.u32 %s314, 1
          %s1799 = scalar_lea.sflag [#allocation3], %s1798
          %s1800 = sand.u32 %s314, 1
          %s1801 = smul.addr %s1800, 16
          %s1802 = scalar_lea.vmem [#allocation2], %s1801
          %1803 = dma.done %s1799, 256
        $region84: #{swin_block_forward.1} parent=79 // pred_fallthru
          _
      $region80: #{swin_block_forward.1} parent=5 // pred_fallthru
        _
    $region6: #{swin_block_forward.1} parent=1 // loop_footer
      %s26 = sadd.s32 1, %s22
    $region7: #{swin_block_forward.1} parent=1 // loop_footer_branch
      %21 = sbr.rel target = $region3
    $region8: #{swin_block_forward.1} parent=1 // loop_exit
      _
    %1804 = vsyncpa [#allocation3], 1
    %s1805 = scalar_lea.sflag [#allocation3], 1
    %1806 = vsyncpa %s1805, 1

</llo_original>
